<compile_context>
chip_gen: v7x
topology: tpu7x:2x2x1
jax: 0.10.0
libtpu: 0.0.40
codegen_flags: <defaults>
</compile_context>

<pallas_src>
import functools

import numpy as np

import jax
import jax.numpy as jnp
from jax.experimental import pallas as pl
from jax.experimental.pallas import tpu as pltpu


# Channel sizes (multiples of 8 so (C, P) slabs are sublane-tile aligned).
C1 = 8    # encoder stage-1 / decoder channels
C2 = 16   # bottleneck channels


# ----------------------------------------------------------------------------
# Host-precomputed constant tables (hoisted out of the kernel grid loop).
# ----------------------------------------------------------------------------
def _tap_masks_np(H, W):
    """f32 (9, H*W) validity masks for the 9 taps of a 3x3 'same'-padded conv."""
    P = H * W
    p = np.arange(P)
    h, w = p // W, p % W
    rows = []
    for di in (-1, 0, 1):
        for dj in (-1, 0, 1):
            rows.append(((h + di >= 0) & (h + di < H) &
                         (w + dj >= 0) & (w + dj < W)).astype(np.float32))
    return np.stack(rows, axis=0)


def _pool_sel_np(H, W):
    """0/1 (H*W, H/2*W/2) selector compacting the even (h, w) 2x2-pool anchors."""
    Ho, Wo = H // 2, W // 2
    P, P4 = H * W, Ho * Wo
    q = np.arange(P4)
    anchor = 2 * (q // Wo) * W + 2 * (q % Wo)
    return (np.arange(P)[:, None] == anchor[None, :]).astype(np.float32)


def _up_sel_np(H, W):
    """0/1 (H/2*W/2, H*W) selector for nearest-neighbor 2x upsampling."""
    Ho, Wo = H // 2, W // 2
    P, P4 = H * W, Ho * Wo
    p = np.arange(P)
    src = (p // W // 2) * Wo + (p % W) // 2
    return (np.arange(P4)[:, None] == src[None, :]).astype(np.float32)


# ----------------------------------------------------------------------------
# In-kernel helpers.  All activations are (C, P) f32 slabs: channels on sublanes,
# pixel index p = h*W + w on lanes.
# ----------------------------------------------------------------------------
def _shift(a, k):
    """b[:, p] = a[:, p + k] (wrapped / zero-filled; callers mask invalid taps)."""
    n = a.shape[-1]
    if k % n == 0:
        return a
    if n % 128 == 0:
        # lane rotation on the XLU slot; wrapped rows are zeroed by the tap masks
        return pltpu.roll(a, shift=(-k) % n, axis=1)
    # sub-vreg lane axis (half-res, 64 lanes): tiny zero-fill slice + concat
    z = jnp.zeros(a.shape[:-1] + (abs(k),), a.dtype)
    if k > 0:
        return jnp.concatenate([a[:, k:], z], axis=1)
    return jnp.concatenate([z, a[:, :k]], axis=1)


def _im2col3x3(a, masks, width):
    """(C, P) f32 + (9, P) tap masks -> (9*C, P) bf16 im2col slab (tap-major rows)."""
    cols = []
    t = 0
    for di in (-1, 0, 1):
        for dj in (-1, 0, 1):
            s = _shift(a, di * width + dj)
            cols.append(s * masks[t:t + 1, :])     # zero out-of-bounds / wrapped taps
            t += 1
    # f32 sublane concat is tile-aligned (C multiple of 8); one cast feeds the MXU.
    return jnp.concatenate(cols, axis=0).astype(jnp.bfloat16)


# ----------------------------------------------------------------------------
# Fused UNet kernel: one grid step = one image, everything stays in VMEM/vregs.
# ----------------------------------------------------------------------------
def _make_unet_kernel(H, W):
    Ho, Wo = H // 2, W // 2

    def kernel(x_ref, mf_ref, mh_ref, ps_ref, us_ref,
               w1_ref, b1_ref, w2_ref, b2_ref,
               w3a_ref, w3b_ref, b3_ref, w4_ref, b4_ref, o_ref):
        mf = mf_ref[...]                   # (9, P)  full-res tap masks (host-built)
        mh = mh_ref[...]                   # (9, P4) half-res tap masks
        x = x_ref[0]                       # (1, P)  single real input channel

        # enc1: 3x3 conv (x3-replication folded into w1) + ReLU
        e1 = jnp.dot(w1_ref[...], _im2col3x3(x, mf, W),
                     preferred_element_type=jnp.float32)
        e1 = jnp.maximum(e1 + b1_ref[...], 0.0)                   # (C1, P)

        # 2x2 / stride-2 max pool: two wrapped shifted maxes (only even anchors are
        # read, so H, W even => no wrapped value is ever selected) + bf16 selector dot.
        m = jnp.maximum(e1, _shift(e1, 1))
        m = jnp.maximum(m, _shift(m, W))
        p1 = jnp.dot(m.astype(jnp.bfloat16), ps_ref[...],
                     preferred_element_type=jnp.float32)           # (C1, P4)

        # enc2 (bottleneck) 3x3 conv + ReLU at half resolution
        e2 = jnp.dot(w2_ref[...], _im2col3x3(p1, mh, Wo),
                     preferred_element_type=jnp.float32)
        e2 = jnp.maximum(e2 + b2_ref[...], 0.0)                    # (C2, P4)

        # nearest 2x upsample back to full resolution (bf16 selector dot)
        u1 = jnp.dot(e2.astype(jnp.bfloat16), us_ref[...],
                     preferred_element_type=jnp.float32)           # (C2, P)

        # dec1: 3x3 conv on concat([u1, e1]) -> weight split along Cin, two dots
        # accumulated in f32 (the skip concat never materializes).
        d1 = (jnp.dot(w3a_ref[...], _im2col3x3(u1, mf, W),
                      preferred_element_type=jnp.float32)
              + jnp.dot(w3b_ref[...], _im2col3x3(e1, mf, W),
                        preferred_element_type=jnp.float32))
        d1 = jnp.maximum(d1 + b3_ref[...], 0.0)                    # (C1, P)

        # 1x1 sigmoid head: (1, C1) x (C1, P) -> lane-dense (1, P) store.
        z = jnp.dot(w4_ref[...], d1.astype(jnp.bfloat16),
                    preferred_element_type=jnp.float32) + b4_ref[...]
        # sigmoid(z) = 0.5*(tanh(z/2)+1): tanh on EUP, no divide, exact [0, 1].
        o_ref[0] = 0.5 * (jnp.tanh(0.5 * z) + 1.0)

    return kernel


def _const_spec(shape):
    # weights / biases / constant tables: whole array, same block for every grid step
    return pl.BlockSpec(shape, lambda n: (0,) * len(shape))


# ----------------------------------------------------------------------------
# Parameters (deterministic synthetic init — no checkpoint loading).
# ----------------------------------------------------------------------------
def _init_conv(key, K, cin, cout):
    wk, bk = jax.random.split(key)
    fan_in = K * K * cin
    w = jax.random.normal(wk, (K, K, cin, cout), jnp.float32) / jnp.sqrt(fan_in)
    b = 0.01 * jax.random.normal(bk, (cout,), jnp.float32)
    return w, b


def init_params(key):
    k1, k2, k3, k4 = jax.random.split(key, 4)
    p = {}
    p["enc1_w"], p["enc1_b"] = _init_conv(k1, 3, 3, C1)          # 3 -> C1
    p["enc2_w"], p["enc2_b"] = _init_conv(k2, 3, C1, C2)         # C1 -> C2
    p["dec1_w"], p["dec1_b"] = _init_conv(k3, 3, C2 + C1, C1)    # skip concat
    p["head_w"], p["head_b"] = _init_conv(k4, 1, C1, 1)          # 1x1 head
    return p


# ----------------------------------------------------------------------------
# Forward pass.  Input/output are NCHW (PyTorch convention).
# ----------------------------------------------------------------------------
def unet_forward(params, x_nchw):
    N, cin, H, W = x_nchw.shape
    assert cin == 1
    # Even H, W required: pool anchors / upsample mapping and the wrap-safe max-pool
    # shifts all rely on it (see kernel comments).
    assert H % 2 == 0 and W % 2 == 0
    P = H * W

    # Host-precomputed constant tables (no per-grid-step iota // % work in-kernel).
    mf = jnp.asarray(_tap_masks_np(H, W))                         # (9, P)   f32
    mh = jnp.asarray(_tap_masks_np(H // 2, W // 2))               # (9, P/4) f32
    ps = jnp.asarray(_pool_sel_np(H, W), dtype=jnp.bfloat16)      # (P, P/4) 0/1, exact
    us = jnp.asarray(_up_sel_np(H, W), dtype=jnp.bfloat16)        # (P/4, P) 0/1, exact

    # torch.cat([x]*3, dim=1) followed by enc1 == enc1 with its weight summed over the
    # 3 input channels -> fold into w1; no replicated input ever hits HBM.
    w1 = jnp.sum(params["enc1_w"], axis=2)                        # (3, 3, C1)
    w1 = jnp.transpose(w1, (2, 0, 1)).reshape(C1, 9).astype(jnp.bfloat16)
    b1 = params["enc1_b"].reshape(C1, 1).astype(jnp.float32)
    w2 = jnp.transpose(params["enc2_w"], (3, 0, 1, 2)).reshape(C2, 9 * C1)
    w2 = w2.astype(jnp.bfloat16)
    b2 = params["enc2_b"].reshape(C2, 1).astype(jnp.float32)
    dw = params["dec1_w"]                                         # (3, 3, C2+C1, C1)
    w3a = jnp.transpose(dw[:, :, :C2, :], (3, 0, 1, 2)).reshape(C1, 9 * C2)
    w3a = w3a.astype(jnp.bfloat16)                                # u1 part
    w3b = jnp.transpose(dw[:, :, C2:, :], (3, 0, 1, 2)).reshape(C1, 9 * C1)
    w3b = w3b.astype(jnp.bfloat16)                                # e1 skip part
    b3 = params["dec1_b"].reshape(C1, 1).astype(jnp.float32)
    w4 = params["head_w"].reshape(C1, 1).T.astype(jnp.bfloat16)   # (1, C1)
    b4 = params["head_b"].reshape(1, 1).astype(jnp.float32)

    # Single real channel, pixels on the lane axis: (N, 1, P).
    x = x_nchw.reshape(N, 1, P).astype(jnp.float32)

    y = pl.pallas_call(
        _make_unet_kernel(H, W),
        out_shape=jax.ShapeDtypeStruct((N, 1, P), jnp.float32),
        grid=(N,),
        in_specs=[
            pl.BlockSpec((1, 1, P), lambda n: (n, 0, 0)),
            _const_spec(mf.shape), _const_spec(mh.shape),
            _const_spec(ps.shape), _const_spec(us.shape),
            _const_spec(w1.shape), _const_spec(b1.shape),
            _const_spec(w2.shape), _const_spec(b2.shape),
            _const_spec(w3a.shape), _const_spec(w3b.shape), _const_spec(b3.shape),
            _const_spec(w4.shape), _const_spec(b4.shape),
        ],
        out_specs=pl.BlockSpec((1, 1, P), lambda n: (n, 0, 0)),
        compiler_params=pltpu.CompilerParams(
            dimension_semantics=("parallel",)),
    )(x, mf, mh, ps, us, w1, b1, w2, b2, w3a, w3b, b3, w4, b4)

    return y.reshape(N, 1, H, W)


if __name__ == "__main__":
    x = jax.random.normal(jax.random.PRNGKey(0), (2, 1, 16, 16), jnp.float32)
    params = init_params(jax.random.PRNGKey(42))

    fwd = jax.jit(functools.partial(unet_forward, params))
    out = jax.block_until_ready(fwd(x))

    assert out.shape == (2, 1, 16, 16), out.shape
    assert out.dtype == jnp.float32
    assert bool(jnp.all(jnp.isfinite(out)))
    assert bool(jnp.all((out >= 0.0) & (out <= 1.0)))            # sigmoid range
    print("KERNEL_OK")
</pallas_src>

<mosaic_0001>
module attributes {stable_mosaic.version = 11 : i64} {
  func.func @kernel(%arg0: i32, %arg1: memref<1x1x256xf32, #tpu.memory_space<vmem>>, %arg2: memref<9x256xf32, #tpu.memory_space<vmem>>, %arg3: memref<9x64xf32, #tpu.memory_space<vmem>>, %arg4: memref<256x64xbf16, #tpu.memory_space<vmem>>, %arg5: memref<64x256xbf16, #tpu.memory_space<vmem>>, %arg6: memref<8x9xbf16, #tpu.memory_space<vmem>>, %arg7: memref<8x1xf32, #tpu.memory_space<vmem>>, %arg8: memref<16x72xbf16, #tpu.memory_space<vmem>>, %arg9: memref<16x1xf32, #tpu.memory_space<vmem>>, %arg10: memref<8x144xbf16, #tpu.memory_space<vmem>>, %arg11: memref<8x72xbf16, #tpu.memory_space<vmem>>, %arg12: memref<8x1xf32, #tpu.memory_space<vmem>>, %arg13: memref<1x8xbf16, #tpu.memory_space<vmem>>, %arg14: memref<1x1xf32, #tpu.memory_space<vmem>>, %arg15: memref<1x1x256xf32, #tpu.memory_space<vmem>>) attributes {dimension_semantics = [#tpu.dimension_semantics<parallel>], iteration_bounds = array<i64: 2>, scalar_prefetch = 0 : i64, scratch_operands = 0 : i64, tpu.core_type = #tpu.core_type<tc>, window_params = [{transform_indices = @transform_0, window_bounds = array<i64: 1, 1, 256>}, {pipeline_mode = #tpu.pipeline_mode<synchronous>, transform_indices = @transform_1, window_bounds = array<i64: 9, 256>}, {pipeline_mode = #tpu.pipeline_mode<synchronous>, transform_indices = @transform_2, window_bounds = array<i64: 9, 64>}, {pipeline_mode = #tpu.pipeline_mode<synchronous>, transform_indices = @transform_3, window_bounds = array<i64: 256, 64>}, {pipeline_mode = #tpu.pipeline_mode<synchronous>, transform_indices = @transform_4, window_bounds = array<i64: 64, 256>}, {pipeline_mode = #tpu.pipeline_mode<synchronous>, transform_indices = @transform_5, window_bounds = array<i64: 8, 9>}, {pipeline_mode = #tpu.pipeline_mode<synchronous>, transform_indices = @transform_6, window_bounds = array<i64: 8, 1>}, {pipeline_mode = #tpu.pipeline_mode<synchronous>, transform_indices = @transform_7, window_bounds = array<i64: 16, 72>}, {pipeline_mode = #tpu.pipeline_mode<synchronous>, transform_indices = @transform_8, window_bounds = array<i64: 16, 1>}, {pipeline_mode = #tpu.pipeline_mode<synchronous>, transform_indices = @transform_9, window_bounds = array<i64: 8, 144>}, {pipeline_mode = #tpu.pipeline_mode<synchronous>, transform_indices = @transform_10, window_bounds = array<i64: 8, 72>}, {pipeline_mode = #tpu.pipeline_mode<synchronous>, transform_indices = @transform_11, window_bounds = array<i64: 8, 1>}, {pipeline_mode = #tpu.pipeline_mode<synchronous>, transform_indices = @transform_12, window_bounds = array<i64: 1, 8>}, {pipeline_mode = #tpu.pipeline_mode<synchronous>, transform_indices = @transform_13, window_bounds = array<i64: 1, 1>}, {transform_indices = @transform_14, window_bounds = array<i64: 1, 1, 256>}]} {
    %c0 = arith.constant 0 : index
    %c0_0 = arith.constant 0 : index
    %0 = vector.load %arg2[%c0, %c0_0] : memref<9x256xf32, #tpu.memory_space<vmem>>, vector<9x256xf32>
    %c0_1 = arith.constant 0 : index
    %c0_2 = arith.constant 0 : index
    %1 = vector.load %arg3[%c0_1, %c0_2] : memref<9x64xf32, #tpu.memory_space<vmem>>, vector<9x64xf32>
    %c0_3 = arith.constant 0 : index
    %c0_4 = arith.constant 0 : index
    %c0_5 = arith.constant 0 : index
    %2 = vector.load %arg1[%c0_3, %c0_4, %c0_5] : memref<1x1x256xf32, #tpu.memory_space<vmem>>, vector<1x1x256xf32>
    %3 = vector.shape_cast %2 : vector<1x1x256xf32> to vector<1x256xf32>
    %c0_6 = arith.constant 0 : index
    %c0_7 = arith.constant 0 : index
    %4 = vector.load %arg6[%c0_6, %c0_7] : memref<8x9xbf16, #tpu.memory_space<vmem>>, vector<8x9xbf16>
    %c17_i32 = arith.constant 17 : i32
    %5 = tpu.dynamic_rotate %3 by %c17_i32 dim 1 : vector<1x256xf32>, i32 -> vector<1x256xf32>
    %6 = vector.extract_strided_slice %0 {offsets = [0, 0], sizes = [1, 256], strides = [1, 1]} : vector<9x256xf32> to vector<1x256xf32>
    %7 = arith.mulf %5, %6 : vector<1x256xf32>
    %c16_i32 = arith.constant 16 : i32
    %8 = tpu.dynamic_rotate %3 by %c16_i32 dim 1 : vector<1x256xf32>, i32 -> vector<1x256xf32>
    %9 = vector.extract_strided_slice %0 {offsets = [1, 0], sizes = [1, 256], strides = [1, 1]} : vector<9x256xf32> to vector<1x256xf32>
    %10 = arith.mulf %8, %9 : vector<1x256xf32>
    %c15_i32 = arith.constant 15 : i32
    %11 = tpu.dynamic_rotate %3 by %c15_i32 dim 1 : vector<1x256xf32>, i32 -> vector<1x256xf32>
    %12 = vector.extract_strided_slice %0 {offsets = [2, 0], sizes = [1, 256], strides = [1, 1]} : vector<9x256xf32> to vector<1x256xf32>
    %13 = arith.mulf %11, %12 : vector<1x256xf32>
    %c1_i32 = arith.constant 1 : i32
    %14 = tpu.dynamic_rotate %3 by %c1_i32 dim 1 : vector<1x256xf32>, i32 -> vector<1x256xf32>
    %15 = vector.extract_strided_slice %0 {offsets = [3, 0], sizes = [1, 256], strides = [1, 1]} : vector<9x256xf32> to vector<1x256xf32>
    %16 = arith.mulf %14, %15 : vector<1x256xf32>
    %17 = vector.extract_strided_slice %0 {offsets = [4, 0], sizes = [1, 256], strides = [1, 1]} : vector<9x256xf32> to vector<1x256xf32>
    %18 = arith.mulf %3, %17 : vector<1x256xf32>
    %c255_i32 = arith.constant 255 : i32
    %19 = tpu.dynamic_rotate %3 by %c255_i32 dim 1 : vector<1x256xf32>, i32 -> vector<1x256xf32>
    %20 = vector.extract_strided_slice %0 {offsets = [5, 0], sizes = [1, 256], strides = [1, 1]} : vector<9x256xf32> to vector<1x256xf32>
    %21 = arith.mulf %19, %20 : vector<1x256xf32>
    %c241_i32 = arith.constant 241 : i32
    %22 = tpu.dynamic_rotate %3 by %c241_i32 dim 1 : vector<1x256xf32>, i32 -> vector<1x256xf32>
    %23 = vector.extract_strided_slice %0 {offsets = [6, 0], sizes = [1, 256], strides = [1, 1]} : vector<9x256xf32> to vector<1x256xf32>
    %24 = arith.mulf %22, %23 : vector<1x256xf32>
    %c240_i32 = arith.constant 240 : i32
    %25 = tpu.dynamic_rotate %3 by %c240_i32 dim 1 : vector<1x256xf32>, i32 -> vector<1x256xf32>
    %26 = vector.extract_strided_slice %0 {offsets = [7, 0], sizes = [1, 256], strides = [1, 1]} : vector<9x256xf32> to vector<1x256xf32>
    %27 = arith.mulf %25, %26 : vector<1x256xf32>
    %c239_i32 = arith.constant 239 : i32
    %28 = tpu.dynamic_rotate %3 by %c239_i32 dim 1 : vector<1x256xf32>, i32 -> vector<1x256xf32>
    %29 = vector.extract_strided_slice %0 {offsets = [8, 0], sizes = [1, 256], strides = [1, 1]} : vector<9x256xf32> to vector<1x256xf32>
    %30 = arith.mulf %28, %29 : vector<1x256xf32>
    %31 = tpu.concatenate %7, %10, %13, %16, %18, %21, %24, %27, %30 in 0 : vector<1x256xf32>, vector<1x256xf32>, vector<1x256xf32>, vector<1x256xf32>, vector<1x256xf32>, vector<1x256xf32>, vector<1x256xf32>, vector<1x256xf32>, vector<1x256xf32> -> vector<9x256xf32>
    %32 = arith.truncf %31 : vector<9x256xf32> to vector<9x256xbf16>
    %cst = arith.constant dense<0.000000e+00> : vector<8x256xf32>
    %33 = tpu.matmul %4, %32, %cst {dimension_numbers = #tpu.dot_dimension_numbers<[1], [0], [0], [1], [0, 0, 1, 1], [], []>} : vector<8x9xbf16>, vector<9x256xbf16>, vector<8x256xf32> -> vector<8x256xf32>
    %c0_8 = arith.constant 0 : index
    %c0_9 = arith.constant 0 : index
    %34 = vector.load %arg7[%c0_8, %c0_9] : memref<8x1xf32, #tpu.memory_space<vmem>>, vector<8x1xf32>
    %35 = vector.broadcast %34 : vector<8x1xf32> to vector<8x256xf32>
    %36 = arith.addf %33, %35 : vector<8x256xf32>
    %cst_10 = arith.constant 0.000000e+00 : f32
    %37 = vector.broadcast %cst_10 : f32 to vector<8x256xf32>
    %38 = arith.maximumf %36, %37 : vector<8x256xf32>
    %c255_i32_11 = arith.constant 255 : i32
    %39 = tpu.dynamic_rotate %38 by %c255_i32_11 dim 1 : vector<8x256xf32>, i32 -> vector<8x256xf32>
    %40 = arith.maximumf %38, %39 : vector<8x256xf32>
    %c240_i32_12 = arith.constant 240 : i32
    %41 = tpu.dynamic_rotate %40 by %c240_i32_12 dim 1 : vector<8x256xf32>, i32 -> vector<8x256xf32>
    %42 = arith.maximumf %40, %41 : vector<8x256xf32>
    %43 = arith.truncf %42 : vector<8x256xf32> to vector<8x256xbf16>
    %c0_13 = arith.constant 0 : index
    %c0_14 = arith.constant 0 : index
    %44 = vector.load %arg4[%c0_13, %c0_14] : memref<256x64xbf16, #tpu.memory_space<vmem>>, vector<256x64xbf16>
    %cst_15 = arith.constant dense<0.000000e+00> : vector<8x64xf32>
    %45 = tpu.matmul %43, %44, %cst_15 {dimension_numbers = #tpu.dot_dimension_numbers<[1], [0], [0], [1], [0, 0, 1, 1], [], []>} : vector<8x256xbf16>, vector<256x64xbf16>, vector<8x64xf32> -> vector<8x64xf32>
    %c0_16 = arith.constant 0 : index
    %c0_17 = arith.constant 0 : index
    %46 = vector.load %arg8[%c0_16, %c0_17] : memref<16x72xbf16, #tpu.memory_space<vmem>>, vector<16x72xbf16>
    %cst_18 = arith.constant 0.000000e+00 : f32
    %47 = vector.broadcast %cst_18 : f32 to vector<8x9xf32>
    %48 = vector.extract_strided_slice %45 {offsets = [0, 0], sizes = [8, 55], strides = [1, 1]} : vector<8x64xf32> to vector<8x55xf32>
    %49 = tpu.concatenate %47, %48 in 1 : vector<8x9xf32>, vector<8x55xf32> -> vector<8x64xf32>
    %50 = vector.extract_strided_slice %1 {offsets = [0, 0], sizes = [1, 64], strides = [1, 1]} : vector<9x64xf32> to vector<1x64xf32>
    %51 = vector.broadcast %50 : vector<1x64xf32> to vector<8x64xf32>
    %52 = arith.mulf %49, %51 : vector<8x64xf32>
    %cst_19 = arith.constant 0.000000e+00 : f32
    %53 = vector.broadcast %cst_19 : f32 to vector<8x8xf32>
    %54 = vector.extract_strided_slice %45 {offsets = [0, 0], sizes = [8, 56], strides = [1, 1]} : vector<8x64xf32> to vector<8x56xf32>
    %55 = tpu.concatenate %53, %54 in 1 : vector<8x8xf32>, vector<8x56xf32> -> vector<8x64xf32>
    %56 = vector.extract_strided_slice %1 {offsets = [1, 0], sizes = [1, 64], strides = [1, 1]} : vector<9x64xf32> to vector<1x64xf32>
    %57 = vector.broadcast %56 : vector<1x64xf32> to vector<8x64xf32>
    %58 = arith.mulf %55, %57 : vector<8x64xf32>
    %cst_20 = arith.constant 0.000000e+00 : f32
    %59 = vector.broadcast %cst_20 : f32 to vector<8x7xf32>
    %60 = vector.extract_strided_slice %45 {offsets = [0, 0], sizes = [8, 57], strides = [1, 1]} : vector<8x64xf32> to vector<8x57xf32>
    %61 = tpu.concatenate %59, %60 in 1 : vector<8x7xf32>, vector<8x57xf32> -> vector<8x64xf32>
    %62 = vector.extract_strided_slice %1 {offsets = [2, 0], sizes = [1, 64], strides = [1, 1]} : vector<9x64xf32> to vector<1x64xf32>
    %63 = vector.broadcast %62 : vector<1x64xf32> to vector<8x64xf32>
    %64 = arith.mulf %61, %63 : vector<8x64xf32>
    %cst_21 = arith.constant 0.000000e+00 : f32
    %65 = vector.broadcast %cst_21 : f32 to vector<8x1xf32>
    %66 = vector.extract_strided_slice %45 {offsets = [0, 0], sizes = [8, 63], strides = [1, 1]} : vector<8x64xf32> to vector<8x63xf32>
    %67 = tpu.concatenate %65, %66 in 1 : vector<8x1xf32>, vector<8x63xf32> -> vector<8x64xf32>
    %68 = vector.extract_strided_slice %1 {offsets = [3, 0], sizes = [1, 64], strides = [1, 1]} : vector<9x64xf32> to vector<1x64xf32>
    %69 = vector.broadcast %68 : vector<1x64xf32> to vector<8x64xf32>
    %70 = arith.mulf %67, %69 : vector<8x64xf32>
    %71 = vector.extract_strided_slice %1 {offsets = [4, 0], sizes = [1, 64], strides = [1, 1]} : vector<9x64xf32> to vector<1x64xf32>
    %72 = vector.broadcast %71 : vector<1x64xf32> to vector<8x64xf32>
    %73 = arith.mulf %45, %72 : vector<8x64xf32>
    %cst_22 = arith.constant 0.000000e+00 : f32
    %74 = vector.broadcast %cst_22 : f32 to vector<8x1xf32>
    %75 = vector.extract_strided_slice %45 {offsets = [0, 1], sizes = [8, 63], strides = [1, 1]} : vector<8x64xf32> to vector<8x63xf32>
    %76 = tpu.concatenate %75, %74 in 1 : vector<8x63xf32>, vector<8x1xf32> -> vector<8x64xf32>
    %77 = vector.extract_strided_slice %1 {offsets = [5, 0], sizes = [1, 64], strides = [1, 1]} : vector<9x64xf32> to vector<1x64xf32>
    %78 = vector.broadcast %77 : vector<1x64xf32> to vector<8x64xf32>
    %79 = arith.mulf %76, %78 : vector<8x64xf32>
    %cst_23 = arith.constant 0.000000e+00 : f32
    %80 = vector.broadcast %cst_23 : f32 to vector<8x7xf32>
    %81 = vector.extract_strided_slice %45 {offsets = [0, 7], sizes = [8, 57], strides = [1, 1]} : vector<8x64xf32> to vector<8x57xf32>
    %82 = tpu.concatenate %81, %80 in 1 : vector<8x57xf32>, vector<8x7xf32> -> vector<8x64xf32>
    %83 = vector.extract_strided_slice %1 {offsets = [6, 0], sizes = [1, 64], strides = [1, 1]} : vector<9x64xf32> to vector<1x64xf32>
    %84 = vector.broadcast %83 : vector<1x64xf32> to vector<8x64xf32>
    %85 = arith.mulf %82, %84 : vector<8x64xf32>
    %cst_24 = arith.constant 0.000000e+00 : f32
    %86 = vector.broadcast %cst_24 : f32 to vector<8x8xf32>
    %87 = vector.extract_strided_slice %45 {offsets = [0, 8], sizes = [8, 56], strides = [1, 1]} : vector<8x64xf32> to vector<8x56xf32>
    %88 = tpu.concatenate %87, %86 in 1 : vector<8x56xf32>, vector<8x8xf32> -> vector<8x64xf32>
    %89 = vector.extract_strided_slice %1 {offsets = [7, 0], sizes = [1, 64], strides = [1, 1]} : vector<9x64xf32> to vector<1x64xf32>
    %90 = vector.broadcast %89 : vector<1x64xf32> to vector<8x64xf32>
    %91 = arith.mulf %88, %90 : vector<8x64xf32>
    %cst_25 = arith.constant 0.000000e+00 : f32
    %92 = vector.broadcast %cst_25 : f32 to vector<8x9xf32>
    %93 = vector.extract_strided_slice %45 {offsets = [0, 9], sizes = [8, 55], strides = [1, 1]} : vector<8x64xf32> to vector<8x55xf32>
    %94 = tpu.concatenate %93, %92 in 1 : vector<8x55xf32>, vector<8x9xf32> -> vector<8x64xf32>
    %95 = vector.extract_strided_slice %1 {offsets = [8, 0], sizes = [1, 64], strides = [1, 1]} : vector<9x64xf32> to vector<1x64xf32>
    %96 = vector.broadcast %95 : vector<1x64xf32> to vector<8x64xf32>
    %97 = arith.mulf %94, %96 : vector<8x64xf32>
    %98 = tpu.concatenate %52, %58, %64, %70, %73, %79, %85, %91, %97 in 0 : vector<8x64xf32>, vector<8x64xf32>, vector<8x64xf32>, vector<8x64xf32>, vector<8x64xf32>, vector<8x64xf32>, vector<8x64xf32>, vector<8x64xf32>, vector<8x64xf32> -> vector<72x64xf32>
    %99 = arith.truncf %98 : vector<72x64xf32> to vector<72x64xbf16>
    %cst_26 = arith.constant dense<0.000000e+00> : vector<16x64xf32>
    %100 = tpu.matmul %46, %99, %cst_26 {dimension_numbers = #tpu.dot_dimension_numbers<[1], [0], [0], [1], [0, 0, 1, 1], [], []>} : vector<16x72xbf16>, vector<72x64xbf16>, vector<16x64xf32> -> vector<16x64xf32>
    %c0_27 = arith.constant 0 : index
    %c0_28 = arith.constant 0 : index
    %101 = vector.load %arg9[%c0_27, %c0_28] : memref<16x1xf32, #tpu.memory_space<vmem>>, vector<16x1xf32>
    %102 = vector.broadcast %101 : vector<16x1xf32> to vector<16x64xf32>
    %103 = arith.addf %100, %102 : vector<16x64xf32>
    %cst_29 = arith.constant 0.000000e+00 : f32
    %104 = vector.broadcast %cst_29 : f32 to vector<16x64xf32>
    %105 = arith.maximumf %103, %104 : vector<16x64xf32>
    %106 = arith.truncf %105 : vector<16x64xf32> to vector<16x64xbf16>
    %c0_30 = arith.constant 0 : index
    %c0_31 = arith.constant 0 : index
    %107 = vector.load %arg5[%c0_30, %c0_31] : memref<64x256xbf16, #tpu.memory_space<vmem>>, vector<64x256xbf16>
    %cst_32 = arith.constant dense<0.000000e+00> : vector<16x256xf32>
    %108 = tpu.matmul %106, %107, %cst_32 {dimension_numbers = #tpu.dot_dimension_numbers<[1], [0], [0], [1], [0, 0, 1, 1], [], []>} : vector<16x64xbf16>, vector<64x256xbf16>, vector<16x256xf32> -> vector<16x256xf32>
    %c0_33 = arith.constant 0 : index
    %c0_34 = arith.constant 0 : index
    %109 = vector.load %arg10[%c0_33, %c0_34] : memref<8x144xbf16, #tpu.memory_space<vmem>>, vector<8x144xbf16>
    %c17_i32_35 = arith.constant 17 : i32
    %110 = tpu.dynamic_rotate %108 by %c17_i32_35 dim 1 : vector<16x256xf32>, i32 -> vector<16x256xf32>
    %111 = vector.extract_strided_slice %0 {offsets = [0, 0], sizes = [1, 256], strides = [1, 1]} : vector<9x256xf32> to vector<1x256xf32>
    %112 = vector.broadcast %111 : vector<1x256xf32> to vector<16x256xf32>
    %113 = arith.mulf %110, %112 : vector<16x256xf32>
    %c16_i32_36 = arith.constant 16 : i32
    %114 = tpu.dynamic_rotate %108 by %c16_i32_36 dim 1 : vector<16x256xf32>, i32 -> vector<16x256xf32>
    %115 = vector.extract_strided_slice %0 {offsets = [1, 0], sizes = [1, 256], strides = [1, 1]} : vector<9x256xf32> to vector<1x256xf32>
    %116 = vector.broadcast %115 : vector<1x256xf32> to vector<16x256xf32>
    %117 = arith.mulf %114, %116 : vector<16x256xf32>
    %c15_i32_37 = arith.constant 15 : i32
    %118 = tpu.dynamic_rotate %108 by %c15_i32_37 dim 1 : vector<16x256xf32>, i32 -> vector<16x256xf32>
    %119 = vector.extract_strided_slice %0 {offsets = [2, 0], sizes = [1, 256], strides = [1, 1]} : vector<9x256xf32> to vector<1x256xf32>
    %120 = vector.broadcast %119 : vector<1x256xf32> to vector<16x256xf32>
    %121 = arith.mulf %118, %120 : vector<16x256xf32>
    %c1_i32_38 = arith.constant 1 : i32
    %122 = tpu.dynamic_rotate %108 by %c1_i32_38 dim 1 : vector<16x256xf32>, i32 -> vector<16x256xf32>
    %123 = vector.extract_strided_slice %0 {offsets = [3, 0], sizes = [1, 256], strides = [1, 1]} : vector<9x256xf32> to vector<1x256xf32>
    %124 = vector.broadcast %123 : vector<1x256xf32> to vector<16x256xf32>
    %125 = arith.mulf %122, %124 : vector<16x256xf32>
    %126 = vector.extract_strided_slice %0 {offsets = [4, 0], sizes = [1, 256], strides = [1, 1]} : vector<9x256xf32> to vector<1x256xf32>
    %127 = vector.broadcast %126 : vector<1x256xf32> to vector<16x256xf32>
    %128 = arith.mulf %108, %127 : vector<16x256xf32>
    %c255_i32_39 = arith.constant 255 : i32
    %129 = tpu.dynamic_rotate %108 by %c255_i32_39 dim 1 : vector<16x256xf32>, i32 -> vector<16x256xf32>
    %130 = vector.extract_strided_slice %0 {offsets = [5, 0], sizes = [1, 256], strides = [1, 1]} : vector<9x256xf32> to vector<1x256xf32>
    %131 = vector.broadcast %130 : vector<1x256xf32> to vector<16x256xf32>
    %132 = arith.mulf %129, %131 : vector<16x256xf32>
    %c241_i32_40 = arith.constant 241 : i32
    %133 = tpu.dynamic_rotate %108 by %c241_i32_40 dim 1 : vector<16x256xf32>, i32 -> vector<16x256xf32>
    %134 = vector.extract_strided_slice %0 {offsets = [6, 0], sizes = [1, 256], strides = [1, 1]} : vector<9x256xf32> to vector<1x256xf32>
    %135 = vector.broadcast %134 : vector<1x256xf32> to vector<16x256xf32>
    %136 = arith.mulf %133, %135 : vector<16x256xf32>
    %c240_i32_41 = arith.constant 240 : i32
    %137 = tpu.dynamic_rotate %108 by %c240_i32_41 dim 1 : vector<16x256xf32>, i32 -> vector<16x256xf32>
    %138 = vector.extract_strided_slice %0 {offsets = [7, 0], sizes = [1, 256], strides = [1, 1]} : vector<9x256xf32> to vector<1x256xf32>
    %139 = vector.broadcast %138 : vector<1x256xf32> to vector<16x256xf32>
    %140 = arith.mulf %137, %139 : vector<16x256xf32>
    %c239_i32_42 = arith.constant 239 : i32
    %141 = tpu.dynamic_rotate %108 by %c239_i32_42 dim 1 : vector<16x256xf32>, i32 -> vector<16x256xf32>
    %142 = vector.extract_strided_slice %0 {offsets = [8, 0], sizes = [1, 256], strides = [1, 1]} : vector<9x256xf32> to vector<1x256xf32>
    %143 = vector.broadcast %142 : vector<1x256xf32> to vector<16x256xf32>
    %144 = arith.mulf %141, %143 : vector<16x256xf32>
    %145 = tpu.concatenate %113, %117, %121, %125, %128, %132, %136, %140, %144 in 0 : vector<16x256xf32>, vector<16x256xf32>, vector<16x256xf32>, vector<16x256xf32>, vector<16x256xf32>, vector<16x256xf32>, vector<16x256xf32>, vector<16x256xf32>, vector<16x256xf32> -> vector<144x256xf32>
    %146 = arith.truncf %145 : vector<144x256xf32> to vector<144x256xbf16>
    %cst_43 = arith.constant dense<0.000000e+00> : vector<8x256xf32>
    %147 = tpu.matmul %109, %146, %cst_43 {dimension_numbers = #tpu.dot_dimension_numbers<[1], [0], [0], [1], [0, 0, 1, 1], [], []>} : vector<8x144xbf16>, vector<144x256xbf16>, vector<8x256xf32> -> vector<8x256xf32>
    %c0_44 = arith.constant 0 : index
    %c0_45 = arith.constant 0 : index
    %148 = vector.load %arg11[%c0_44, %c0_45] : memref<8x72xbf16, #tpu.memory_space<vmem>>, vector<8x72xbf16>
    %c17_i32_46 = arith.constant 17 : i32
    %149 = tpu.dynamic_rotate %38 by %c17_i32_46 dim 1 : vector<8x256xf32>, i32 -> vector<8x256xf32>
    %150 = vector.extract_strided_slice %0 {offsets = [0, 0], sizes = [1, 256], strides = [1, 1]} : vector<9x256xf32> to vector<1x256xf32>
    %151 = vector.broadcast %150 : vector<1x256xf32> to vector<8x256xf32>
    %152 = arith.mulf %149, %151 : vector<8x256xf32>
    %c16_i32_47 = arith.constant 16 : i32
    %153 = tpu.dynamic_rotate %38 by %c16_i32_47 dim 1 : vector<8x256xf32>, i32 -> vector<8x256xf32>
    %154 = vector.extract_strided_slice %0 {offsets = [1, 0], sizes = [1, 256], strides = [1, 1]} : vector<9x256xf32> to vector<1x256xf32>
    %155 = vector.broadcast %154 : vector<1x256xf32> to vector<8x256xf32>
    %156 = arith.mulf %153, %155 : vector<8x256xf32>
    %c15_i32_48 = arith.constant 15 : i32
    %157 = tpu.dynamic_rotate %38 by %c15_i32_48 dim 1 : vector<8x256xf32>, i32 -> vector<8x256xf32>
    %158 = vector.extract_strided_slice %0 {offsets = [2, 0], sizes = [1, 256], strides = [1, 1]} : vector<9x256xf32> to vector<1x256xf32>
    %159 = vector.broadcast %158 : vector<1x256xf32> to vector<8x256xf32>
    %160 = arith.mulf %157, %159 : vector<8x256xf32>
    %c1_i32_49 = arith.constant 1 : i32
    %161 = tpu.dynamic_rotate %38 by %c1_i32_49 dim 1 : vector<8x256xf32>, i32 -> vector<8x256xf32>
    %162 = vector.extract_strided_slice %0 {offsets = [3, 0], sizes = [1, 256], strides = [1, 1]} : vector<9x256xf32> to vector<1x256xf32>
    %163 = vector.broadcast %162 : vector<1x256xf32> to vector<8x256xf32>
    %164 = arith.mulf %161, %163 : vector<8x256xf32>
    %165 = vector.extract_strided_slice %0 {offsets = [4, 0], sizes = [1, 256], strides = [1, 1]} : vector<9x256xf32> to vector<1x256xf32>
    %166 = vector.broadcast %165 : vector<1x256xf32> to vector<8x256xf32>
    %167 = arith.mulf %38, %166 : vector<8x256xf32>
    %c255_i32_50 = arith.constant 255 : i32
    %168 = tpu.dynamic_rotate %38 by %c255_i32_50 dim 1 : vector<8x256xf32>, i32 -> vector<8x256xf32>
    %169 = vector.extract_strided_slice %0 {offsets = [5, 0], sizes = [1, 256], strides = [1, 1]} : vector<9x256xf32> to vector<1x256xf32>
    %170 = vector.broadcast %169 : vector<1x256xf32> to vector<8x256xf32>
    %171 = arith.mulf %168, %170 : vector<8x256xf32>
    %c241_i32_51 = arith.constant 241 : i32
    %172 = tpu.dynamic_rotate %38 by %c241_i32_51 dim 1 : vector<8x256xf32>, i32 -> vector<8x256xf32>
    %173 = vector.extract_strided_slice %0 {offsets = [6, 0], sizes = [1, 256], strides = [1, 1]} : vector<9x256xf32> to vector<1x256xf32>
    %174 = vector.broadcast %173 : vector<1x256xf32> to vector<8x256xf32>
    %175 = arith.mulf %172, %174 : vector<8x256xf32>
    %c240_i32_52 = arith.constant 240 : i32
    %176 = tpu.dynamic_rotate %38 by %c240_i32_52 dim 1 : vector<8x256xf32>, i32 -> vector<8x256xf32>
    %177 = vector.extract_strided_slice %0 {offsets = [7, 0], sizes = [1, 256], strides = [1, 1]} : vector<9x256xf32> to vector<1x256xf32>
    %178 = vector.broadcast %177 : vector<1x256xf32> to vector<8x256xf32>
    %179 = arith.mulf %176, %178 : vector<8x256xf32>
    %c239_i32_53 = arith.constant 239 : i32
    %180 = tpu.dynamic_rotate %38 by %c239_i32_53 dim 1 : vector<8x256xf32>, i32 -> vector<8x256xf32>
    %181 = vector.extract_strided_slice %0 {offsets = [8, 0], sizes = [1, 256], strides = [1, 1]} : vector<9x256xf32> to vector<1x256xf32>
    %182 = vector.broadcast %181 : vector<1x256xf32> to vector<8x256xf32>
    %183 = arith.mulf %180, %182 : vector<8x256xf32>
    %184 = tpu.concatenate %152, %156, %160, %164, %167, %171, %175, %179, %183 in 0 : vector<8x256xf32>, vector<8x256xf32>, vector<8x256xf32>, vector<8x256xf32>, vector<8x256xf32>, vector<8x256xf32>, vector<8x256xf32>, vector<8x256xf32>, vector<8x256xf32> -> vector<72x256xf32>
    %185 = arith.truncf %184 : vector<72x256xf32> to vector<72x256xbf16>
    %cst_54 = arith.constant dense<0.000000e+00> : vector<8x256xf32>
    %186 = tpu.matmul %148, %185, %cst_54 {dimension_numbers = #tpu.dot_dimension_numbers<[1], [0], [0], [1], [0, 0, 1, 1], [], []>} : vector<8x72xbf16>, vector<72x256xbf16>, vector<8x256xf32> -> vector<8x256xf32>
    %187 = arith.addf %147, %186 : vector<8x256xf32>
    %c0_55 = arith.constant 0 : index
    %c0_56 = arith.constant 0 : index
    %188 = vector.load %arg12[%c0_55, %c0_56] : memref<8x1xf32, #tpu.memory_space<vmem>>, vector<8x1xf32>
    %189 = vector.broadcast %188 : vector<8x1xf32> to vector<8x256xf32>
    %190 = arith.addf %187, %189 : vector<8x256xf32>
    %cst_57 = arith.constant 0.000000e+00 : f32
    %191 = vector.broadcast %cst_57 : f32 to vector<8x256xf32>
    %192 = arith.maximumf %190, %191 : vector<8x256xf32>
    %c0_58 = arith.constant 0 : index
    %c0_59 = arith.constant 0 : index
    %193 = vector.load %arg13[%c0_58, %c0_59] : memref<1x8xbf16, #tpu.memory_space<vmem>>, vector<1x8xbf16>
    %194 = arith.truncf %192 : vector<8x256xf32> to vector<8x256xbf16>
    %cst_60 = arith.constant dense<0.000000e+00> : vector<1x256xf32>
    %195 = tpu.matmul %193, %194, %cst_60 {dimension_numbers = #tpu.dot_dimension_numbers<[1], [0], [0], [1], [0, 0, 1, 1], [], []>} : vector<1x8xbf16>, vector<8x256xbf16>, vector<1x256xf32> -> vector<1x256xf32>
    %c0_61 = arith.constant 0 : index
    %c0_62 = arith.constant 0 : index
    %196 = vector.load %arg14[%c0_61, %c0_62] : memref<1x1xf32, #tpu.memory_space<vmem>>, vector<1x1xf32>
    %197 = vector.broadcast %196 : vector<1x1xf32> to vector<1x256xf32>
    %198 = arith.addf %195, %197 : vector<1x256xf32>
    %cst_63 = arith.constant 5.000000e-01 : f32
    %199 = vector.broadcast %cst_63 : f32 to vector<1x256xf32>
    %200 = arith.mulf %199, %198 : vector<1x256xf32>
    %201 = math.tanh %200 : vector<1x256xf32>
    %cst_64 = arith.constant 1.000000e+00 : f32
    %202 = vector.broadcast %cst_64 : f32 to vector<1x256xf32>
    %203 = arith.addf %201, %202 : vector<1x256xf32>
    %cst_65 = arith.constant 5.000000e-01 : f32
    %204 = vector.broadcast %cst_65 : f32 to vector<1x256xf32>
    %205 = arith.mulf %204, %203 : vector<1x256xf32>
    %c0_66 = arith.constant 0 : index
    %c0_67 = arith.constant 0 : index
    %c0_68 = arith.constant 0 : index
    %206 = vector.load %arg15[%c0_66, %c0_67, %c0_68] : memref<1x1x256xf32, #tpu.memory_space<vmem>>, vector<1x1x256xf32>
    %207 = vector.shape_cast %206 : vector<1x1x256xf32> to vector<1x256xf32>
    %208 = vector.shape_cast %205 : vector<1x256xf32> to vector<1x1x256xf32>
    tpu.vector_store %arg15[%c0_66, %c0_67, %c0_68], %208 {strides = array<i32>} : memref<1x1x256xf32, #tpu.memory_space<vmem>>, vector<1x1x256xf32>,
    return
  }
  func.func @transform_0(%arg0: i32) -> (i32, i32, i32) {
    %c0_i32 = arith.constant 0 : i32
    %c0_i32_0 = arith.constant 0 : i32
    %c0_i32_1 = arith.constant 0 : i32
    return %arg0, %c0_i32, %c0_i32_0 : i32, i32, i32
  }
  func.func @transform_1(%arg0: i32) -> (i32, i32) {
    %c0_i32 = arith.constant 0 : i32
    %c0_i32_0 = arith.constant 0 : i32
    %c0_i32_1 = arith.constant 0 : i32
    return %c0_i32, %c0_i32_0 : i32, i32
  }
  func.func @transform_2(%arg0: i32) -> (i32, i32) {
    %c0_i32 = arith.constant 0 : i32
    %c0_i32_0 = arith.constant 0 : i32
    %c0_i32_1 = arith.constant 0 : i32
    return %c0_i32, %c0_i32_0 : i32, i32
  }
  func.func @transform_3(%arg0: i32) -> (i32, i32) {
    %c0_i32 = arith.constant 0 : i32
    %c0_i32_0 = arith.constant 0 : i32
    %c0_i32_1 = arith.constant 0 : i32
    return %c0_i32, %c0_i32_0 : i32, i32
  }
  func.func @transform_4(%arg0: i32) -> (i32, i32) {
    %c0_i32 = arith.constant 0 : i32
    %c0_i32_0 = arith.constant 0 : i32
    %c0_i32_1 = arith.constant 0 : i32
    return %c0_i32, %c0_i32_0 : i32, i32
  }
  func.func @transform_5(%arg0: i32) -> (i32, i32) {
    %c0_i32 = arith.constant 0 : i32
    %c0_i32_0 = arith.constant 0 : i32
    %c0_i32_1 = arith.constant 0 : i32
    return %c0_i32, %c0_i32_0 : i32, i32
  }
  func.func @transform_6(%arg0: i32) -> (i32, i32) {
    %c0_i32 = arith.constant 0 : i32
    %c0_i32_0 = arith.constant 0 : i32
    %c0_i32_1 = arith.constant 0 : i32
    return %c0_i32, %c0_i32_0 : i32, i32
  }
  func.func @transform_7(%arg0: i32) -> (i32, i32) {
    %c0_i32 = arith.constant 0 : i32
    %c0_i32_0 = arith.constant 0 : i32
    %c0_i32_1 = arith.constant 0 : i32
    return %c0_i32, %c0_i32_0 : i32, i32
  }
  func.func @transform_8(%arg0: i32) -> (i32, i32) {
    %c0_i32 = arith.constant 0 : i32
    %c0_i32_0 = arith.constant 0 : i32
    %c0_i32_1 = arith.constant 0 : i32
    return %c0_i32, %c0_i32_0 : i32, i32
  }
  func.func @transform_9(%arg0: i32) -> (i32, i32) {
    %c0_i32 = arith.constant 0 : i32
    %c0_i32_0 = arith.constant 0 : i32
    %c0_i32_1 = arith.constant 0 : i32
    return %c0_i32, %c0_i32_0 : i32, i32
  }
  func.func @transform_10(%arg0: i32) -> (i32, i32) {
    %c0_i32 = arith.constant 0 : i32
    %c0_i32_0 = arith.constant 0 : i32
    %c0_i32_1 = arith.constant 0 : i32
    return %c0_i32, %c0_i32_0 : i32, i32
  }
  func.func @transform_11(%arg0: i32) -> (i32, i32) {
    %c0_i32 = arith.constant 0 : i32
    %c0_i32_0 = arith.constant 0 : i32
    %c0_i32_1 = arith.constant 0 : i32
    return %c0_i32, %c0_i32_0 : i32, i32
  }
  func.func @transform_12(%arg0: i32) -> (i32, i32) {
    %c0_i32 = arith.constant 0 : i32
    %c0_i32_0 = arith.constant 0 : i32
    %c0_i32_1 = arith.constant 0 : i32
    return %c0_i32, %c0_i32_0 : i32, i32
  }
  func.func @transform_13(%arg0: i32) -> (i32, i32) {
    %c0_i32 = arith.constant 0 : i32
    %c0_i32_0 = arith.constant 0 : i32
    %c0_i32_1 = arith.constant 0 : i32
    return %c0_i32, %c0_i32_0 : i32, i32
  }
  func.func @transform_14(%arg0: i32) -> (i32, i32, i32) {
    %c0_i32 = arith.constant 0 : i32
    %c0_i32_0 = arith.constant 0 : i32
    %c0_i32_1 = arith.constant 0 : i32
    return %arg0, %c0_i32, %c0_i32_0 : i32, i32, i32
  }
}

</mosaic_0001>

<llo_original>
// kernel: unet_forward.1
$region0: #{unet_forward.1}
  #allocation0 [shape = 'u32[]', space=smem, size = 0x4, offset = 0x4, fixed_abs, tag = 'smem constant byte address 0x4 - core index']
  #allocation1 [shape = 'u32[144,128]{1,0:T(1,128)}', space=vmem, size = 0x12000, scoped, tag = 'internal scratch']
  #allocation2 [shape = 'f32[1,1]{1,0:T(1,128)S(1)}', space=vmem, size = 0x200, scoped, tag = 'scoped memory for unet_forward.1']
  %s0 = inlined_call_operand.vmem [shape: f32[2,1,256], index: 0, kind: input, shape index: {}]
  %s1 = inlined_call_operand.vmem [shape: f32[9,256], index: 1, kind: input, shape index: {}]
  %s2 = inlined_call_operand.vmem [shape: f32[9,64], index: 2, kind: input, shape index: {}]
  %s3 = inlined_call_operand.vmem [shape: bf16[256,64], index: 3, kind: input, shape index: {}]
  %s4 = inlined_call_operand.vmem [shape: bf16[64,256], index: 4, kind: input, shape index: {}]
  %s5 = inlined_call_operand.hbm [shape: bf16[8,9], index: 5, kind: input, shape index: {}]
  %s6 = inlined_call_operand.vmem [shape: f32[8,1], index: 6, kind: input, shape index: {}]
  %s7 = inlined_call_operand.vmem [shape: bf16[16,72], index: 7, kind: input, shape index: {}]
  %s8 = inlined_call_operand.vmem [shape: f32[16,1], index: 8, kind: input, shape index: {}]
  %s9 = inlined_call_operand.vmem [shape: bf16[8,144], index: 9, kind: input, shape index: {}]
  %s10 = inlined_call_operand.hbm [shape: bf16[8,72], index: 10, kind: input, shape index: {}]
  %s11 = inlined_call_operand.vmem [shape: f32[8,1], index: 11, kind: input, shape index: {}]
  %s12 = inlined_call_operand.hbm [shape: bf16[1,8], index: 12, kind: input, shape index: {}]
  %s13 = inlined_call_operand.<no memory space> [shape: f32[1,1], index: 13, kind: input, shape index: {}]
  %s14 = inlined_call_operand.vmem [shape: f32[2,1,256], index: 14, kind: output, shape index: {}]
  %s15 = sld [smem:[#allocation0]]
  $region101: #{unet_forward.1} parent=0
    _
  %s17 = ssub.s32 1, %s15
  %s18 = scalar_select 0, %s17, %s15
  %v19 = vstv %s13
  %20 = vst [vmem:[#allocation2] sm:$0x1] %v19
  $region1: #{unet_forward.1} parent=0
    #allocation3 [shape = 'u8[2048]{0}', space=vmem, size = 0x800, scoped, tag = 'input window, operand 5, single buffered']
    #allocation4 [shape = 's32[2]{0}', space=sflag, size = 0x8, scoped, tag = 'scoped memory for unet_forward.1']
    #allocation5 [shape = 'u8[2048]{0}', space=vmem, size = 0x800, scoped, tag = 'input window, operand 10, single buffered']
    #allocation6 [shape = 's32[1]{0}', space=sflag, size = 0x4, scoped, tag = 'scoped memory for unet_forward.1']
    #allocation7 [shape = 'u8[512]{0}', space=vmem, size = 0x400, scoped, tag = 'input window, operand 12, single buffered']
    %21 = vsyncpa [#allocation4], 0
    %22 = vsyncpa [#allocation6], 0
    loop: start=0, step=1, limit=4
    $region2: #{unet_forward.1} parent=1 // loop_pre_header
      _
    $region3: #{unet_forward.1} parent=1 // loop_header
      %s24 = sphi 0, %s28
      %p25 = scmp.ge.s32.totalorder %s24, 4
      %s34 = sphi 0, %s36
      %s37 = sphi 0, %s34
      %s38 = sphi 0, %s37
      %s54 = sphi 0, %s38
      %s58 = sphi 0, %s58
      %s60 = sphi 0, %s58
      %s61 = sphi 0, %s60
      %s75 = sphi 0, %s61
      %s79 = sphi 0, %s79
      %s81 = sphi 0, %s79
      %s82 = sphi 0, %s81
      %s96 = sphi 0, %s82
      %s100 = sphi 0, %s100
      %s102 = sphi 0, %s100
      %s103 = sphi 0, %s102
      %s117 = sphi 0, %s103
      %s121 = sphi 0, %s121
      %s123 = sphi 0, %s121
      %s124 = sphi 0, %s123
      %s138 = sphi 0, %s124
      %s142 = sphi 0, %s142
      %s144 = sphi 0, %s142
      %s145 = sphi 0, %s144
      %s159 = sphi 0, %s145
      %s163 = sphi 0, %s163
      %s165 = sphi 0, %s163
      %s166 = sphi 0, %s165
      %s180 = sphi 0, %s166
      %s184 = sphi 0, %s184
      %s186 = sphi 0, %s184
      %s187 = sphi 0, %s186
      %s201 = sphi 0, %s187
      %s205 = sphi 0, %s205
      %s207 = sphi 0, %s205
      %s208 = sphi 0, %s207
      %s222 = sphi 0, %s208
      %s226 = sphi 0, %s226
      %s228 = sphi 0, %s226
      %s229 = sphi 0, %s228
      %s243 = sphi 0, %s229
      %s247 = sphi 0, %s247
      %s249 = sphi 0, %s247
      %s250 = sphi 0, %s249
      %s264 = sphi 0, %s250
      %s268 = sphi 0, %s268
      %s270 = sphi 0, %s268
      %s271 = sphi 0, %s270
      %s285 = sphi 0, %s271
      %s289 = sphi 0, %s289
      %s291 = sphi 0, %s289
      %s292 = sphi 0, %s291
      %s306 = sphi 0, %s292
      %s310 = sphi 0, %s310
      %s312 = sphi 0, %s310
      %s313 = sphi 0, %s312
      %s327 = sphi 0, %s313
      %s333 = sphi 0, %s335
      %s336 = sphi 0, %s333
      %s337 = sphi 0, %s336
      %s353 = sphi 0, %s337
    $region4: #{unet_forward.1} parent=1 // loop_header_branch
      %27 = sbr.rel (%p25) target = $region8
    $region5: #{unet_forward.1} parent=1 // loop_body
      %s29 = ssub.s32 %s24, 1
      %s30 = ssub.s32 %s24, 2
      %s31 = sadd.s32 %s24, 1
      %s32 = ssub.s32 %s24, %s31
      %p33 = scmp.eq.s32.totalorder %s32, 0
      %s35 = sadd.s32 %s34, 1
      %s36 = scalar_select %p33, %s34, %s35
      %p39 = pneg %p33
      %p40 = scmp.eq.s32.totalorder %s24, 1
      %p41 = por %p39, %p40
      %p42 = scmp.ne.s32.totalorder %s34, %s37
      %p43 = scmp.eq.s32.totalorder %s24, 0
      %p44 = por %p42, %p43
      %p45 = scmp.ne.s32.totalorder %s34, %s37
      %p46 = scmp.eq.s32.totalorder %s29, 1
      %p47 = por %p45, %p46
      %p48 = scmp.ne.s32.totalorder %s37, %s38
      %p49 = scmp.eq.s32.totalorder %s29, 0
      %p50 = por %p48, %p49
      %p51 = scmp.ne.s32.totalorder %s37, %s38
      %p52 = scmp.eq.s32.totalorder %s30, 1
      %p53 = por %p51, %p52
      %p55 = scmp.ne.s32.totalorder %s38, %s54
      %p56 = scmp.eq.s32.totalorder %s30, 0
      %p57 = por %p55, %p56
      %s59 = sadd.s32 %s58, 1
      %p62 = scmp.eq.s32.totalorder %s24, 1
      %p63 = scmp.ne.s32.totalorder %s58, %s60
      %p64 = scmp.eq.s32.totalorder %s24, 0
      %p65 = por %p63, %p64
      %p66 = scmp.ne.s32.totalorder %s58, %s60
      %p67 = scmp.eq.s32.totalorder %s29, 1
      %p68 = por %p66, %p67
      %p69 = scmp.ne.s32.totalorder %s60, %s61
      %p70 = scmp.eq.s32.totalorder %s29, 0
      %p71 = por %p69, %p70
      %p72 = scmp.ne.s32.totalorder %s60, %s61
      %p73 = scmp.eq.s32.totalorder %s30, 1
      %p74 = por %p72, %p73
      %p76 = scmp.ne.s32.totalorder %s61, %s75
      %p77 = scmp.eq.s32.totalorder %s30, 0
      %p78 = por %p76, %p77
      %s80 = sadd.s32 %s79, 1
      %p83 = scmp.eq.s32.totalorder %s24, 1
      %p84 = scmp.ne.s32.totalorder %s79, %s81
      %p85 = scmp.eq.s32.totalorder %s24, 0
      %p86 = por %p84, %p85
      %p87 = scmp.ne.s32.totalorder %s79, %s81
      %p88 = scmp.eq.s32.totalorder %s29, 1
      %p89 = por %p87, %p88
      %p90 = scmp.ne.s32.totalorder %s81, %s82
      %p91 = scmp.eq.s32.totalorder %s29, 0
      %p92 = por %p90, %p91
      %p93 = scmp.ne.s32.totalorder %s81, %s82
      %p94 = scmp.eq.s32.totalorder %s30, 1
      %p95 = por %p93, %p94
      %p97 = scmp.ne.s32.totalorder %s82, %s96
      %p98 = scmp.eq.s32.totalorder %s30, 0
      %p99 = por %p97, %p98
      %s101 = sadd.s32 %s100, 1
      %p104 = scmp.eq.s32.totalorder %s24, 1
      %p105 = scmp.ne.s32.totalorder %s100, %s102
      %p106 = scmp.eq.s32.totalorder %s24, 0
      %p107 = por %p105, %p106
      %p108 = scmp.ne.s32.totalorder %s100, %s102
      %p109 = scmp.eq.s32.totalorder %s29, 1
      %p110 = por %p108, %p109
      %p111 = scmp.ne.s32.totalorder %s102, %s103
      %p112 = scmp.eq.s32.totalorder %s29, 0
      %p113 = por %p111, %p112
      %p114 = scmp.ne.s32.totalorder %s102, %s103
      %p115 = scmp.eq.s32.totalorder %s30, 1
      %p116 = por %p114, %p115
      %p118 = scmp.ne.s32.totalorder %s103, %s117
      %p119 = scmp.eq.s32.totalorder %s30, 0
      %p120 = por %p118, %p119
      %s122 = sadd.s32 %s121, 1
      %p125 = scmp.eq.s32.totalorder %s24, 1
      %p126 = scmp.ne.s32.totalorder %s121, %s123
      %p127 = scmp.eq.s32.totalorder %s24, 0
      %p128 = por %p126, %p127
      %p129 = scmp.ne.s32.totalorder %s121, %s123
      %p130 = scmp.eq.s32.totalorder %s29, 1
      %p131 = por %p129, %p130
      %p132 = scmp.ne.s32.totalorder %s123, %s124
      %p133 = scmp.eq.s32.totalorder %s29, 0
      %p134 = por %p132, %p133
      %p135 = scmp.ne.s32.totalorder %s123, %s124
      %p136 = scmp.eq.s32.totalorder %s30, 1
      %p137 = por %p135, %p136
      %p139 = scmp.ne.s32.totalorder %s124, %s138
      %p140 = scmp.eq.s32.totalorder %s30, 0
      %p141 = por %p139, %p140
      %s143 = sadd.s32 %s142, 1
      %p146 = scmp.eq.s32.totalorder %s24, 1
      %p147 = scmp.ne.s32.totalorder %s142, %s144
      %p148 = scmp.eq.s32.totalorder %s24, 0
      %p149 = por %p147, %p148
      %p150 = scmp.ne.s32.totalorder %s142, %s144
      %p151 = scmp.eq.s32.totalorder %s29, 1
      %p152 = por %p150, %p151
      %p153 = scmp.ne.s32.totalorder %s144, %s145
      %p154 = scmp.eq.s32.totalorder %s29, 0
      %p155 = por %p153, %p154
      %p156 = scmp.ne.s32.totalorder %s144, %s145
      %p157 = scmp.eq.s32.totalorder %s30, 1
      %p158 = por %p156, %p157
      %p160 = scmp.ne.s32.totalorder %s145, %s159
      %p161 = scmp.eq.s32.totalorder %s30, 0
      %p162 = por %p160, %p161
      %s164 = sadd.s32 %s163, 1
      %p167 = scmp.eq.s32.totalorder %s24, 1
      %p168 = scmp.ne.s32.totalorder %s163, %s165
      %p169 = scmp.eq.s32.totalorder %s24, 0
      %p170 = por %p168, %p169
      %p171 = scmp.ne.s32.totalorder %s163, %s165
      %p172 = scmp.eq.s32.totalorder %s29, 1
      %p173 = por %p171, %p172
      %p174 = scmp.ne.s32.totalorder %s165, %s166
      %p175 = scmp.eq.s32.totalorder %s29, 0
      %p176 = por %p174, %p175
      %p177 = scmp.ne.s32.totalorder %s165, %s166
      %p178 = scmp.eq.s32.totalorder %s30, 1
      %p179 = por %p177, %p178
      %p181 = scmp.ne.s32.totalorder %s166, %s180
      %p182 = scmp.eq.s32.totalorder %s30, 0
      %p183 = por %p181, %p182
      %s185 = sadd.s32 %s184, 1
      %p188 = scmp.eq.s32.totalorder %s24, 1
      %p189 = scmp.ne.s32.totalorder %s184, %s186
      %p190 = scmp.eq.s32.totalorder %s24, 0
      %p191 = por %p189, %p190
      %p192 = scmp.ne.s32.totalorder %s184, %s186
      %p193 = scmp.eq.s32.totalorder %s29, 1
      %p194 = por %p192, %p193
      %p195 = scmp.ne.s32.totalorder %s186, %s187
      %p196 = scmp.eq.s32.totalorder %s29, 0
      %p197 = por %p195, %p196
      %p198 = scmp.ne.s32.totalorder %s186, %s187
      %p199 = scmp.eq.s32.totalorder %s30, 1
      %p200 = por %p198, %p199
      %p202 = scmp.ne.s32.totalorder %s187, %s201
      %p203 = scmp.eq.s32.totalorder %s30, 0
      %p204 = por %p202, %p203
      %s206 = sadd.s32 %s205, 1
      %p209 = scmp.eq.s32.totalorder %s24, 1
      %p210 = scmp.ne.s32.totalorder %s205, %s207
      %p211 = scmp.eq.s32.totalorder %s24, 0
      %p212 = por %p210, %p211
      %p213 = scmp.ne.s32.totalorder %s205, %s207
      %p214 = scmp.eq.s32.totalorder %s29, 1
      %p215 = por %p213, %p214
      %p216 = scmp.ne.s32.totalorder %s207, %s208
      %p217 = scmp.eq.s32.totalorder %s29, 0
      %p218 = por %p216, %p217
      %p219 = scmp.ne.s32.totalorder %s207, %s208
      %p220 = scmp.eq.s32.totalorder %s30, 1
      %p221 = por %p219, %p220
      %p223 = scmp.ne.s32.totalorder %s208, %s222
      %p224 = scmp.eq.s32.totalorder %s30, 0
      %p225 = por %p223, %p224
      %s227 = sadd.s32 %s226, 1
      %p230 = scmp.eq.s32.totalorder %s24, 1
      %p231 = scmp.ne.s32.totalorder %s226, %s228
      %p232 = scmp.eq.s32.totalorder %s24, 0
      %p233 = por %p231, %p232
      %p234 = scmp.ne.s32.totalorder %s226, %s228
      %p235 = scmp.eq.s32.totalorder %s29, 1
      %p236 = por %p234, %p235
      %p237 = scmp.ne.s32.totalorder %s228, %s229
      %p238 = scmp.eq.s32.totalorder %s29, 0
      %p239 = por %p237, %p238
      %p240 = scmp.ne.s32.totalorder %s228, %s229
      %p241 = scmp.eq.s32.totalorder %s30, 1
      %p242 = por %p240, %p241
      %p244 = scmp.ne.s32.totalorder %s229, %s243
      %p245 = scmp.eq.s32.totalorder %s30, 0
      %p246 = por %p244, %p245
      %s248 = sadd.s32 %s247, 1
      %p251 = scmp.eq.s32.totalorder %s24, 1
      %p252 = scmp.ne.s32.totalorder %s247, %s249
      %p253 = scmp.eq.s32.totalorder %s24, 0
      %p254 = por %p252, %p253
      %p255 = scmp.ne.s32.totalorder %s247, %s249
      %p256 = scmp.eq.s32.totalorder %s29, 1
      %p257 = por %p255, %p256
      %p258 = scmp.ne.s32.totalorder %s249, %s250
      %p259 = scmp.eq.s32.totalorder %s29, 0
      %p260 = por %p258, %p259
      %p261 = scmp.ne.s32.totalorder %s249, %s250
      %p262 = scmp.eq.s32.totalorder %s30, 1
      %p263 = por %p261, %p262
      %p265 = scmp.ne.s32.totalorder %s250, %s264
      %p266 = scmp.eq.s32.totalorder %s30, 0
      %p267 = por %p265, %p266
      %s269 = sadd.s32 %s268, 1
      %p272 = scmp.eq.s32.totalorder %s24, 1
      %p273 = scmp.ne.s32.totalorder %s268, %s270
      %p274 = scmp.eq.s32.totalorder %s24, 0
      %p275 = por %p273, %p274
      %p276 = scmp.ne.s32.totalorder %s268, %s270
      %p277 = scmp.eq.s32.totalorder %s29, 1
      %p278 = por %p276, %p277
      %p279 = scmp.ne.s32.totalorder %s270, %s271
      %p280 = scmp.eq.s32.totalorder %s29, 0
      %p281 = por %p279, %p280
      %p282 = scmp.ne.s32.totalorder %s270, %s271
      %p283 = scmp.eq.s32.totalorder %s30, 1
      %p284 = por %p282, %p283
      %p286 = scmp.ne.s32.totalorder %s271, %s285
      %p287 = scmp.eq.s32.totalorder %s30, 0
      %p288 = por %p286, %p287
      %s290 = sadd.s32 %s289, 1
      %p293 = scmp.eq.s32.totalorder %s24, 1
      %p294 = scmp.ne.s32.totalorder %s289, %s291
      %p295 = scmp.eq.s32.totalorder %s24, 0
      %p296 = por %p294, %p295
      %p297 = scmp.ne.s32.totalorder %s289, %s291
      %p298 = scmp.eq.s32.totalorder %s29, 1
      %p299 = por %p297, %p298
      %p300 = scmp.ne.s32.totalorder %s291, %s292
      %p301 = scmp.eq.s32.totalorder %s29, 0
      %p302 = por %p300, %p301
      %p303 = scmp.ne.s32.totalorder %s291, %s292
      %p304 = scmp.eq.s32.totalorder %s30, 1
      %p305 = por %p303, %p304
      %p307 = scmp.ne.s32.totalorder %s292, %s306
      %p308 = scmp.eq.s32.totalorder %s30, 0
      %p309 = por %p307, %p308
      %s311 = sadd.s32 %s310, 1
      %p314 = scmp.eq.s32.totalorder %s24, 1
      %p315 = scmp.ne.s32.totalorder %s310, %s312
      %p316 = scmp.eq.s32.totalorder %s24, 0
      %p317 = por %p315, %p316
      %p318 = scmp.ne.s32.totalorder %s310, %s312
      %p319 = scmp.eq.s32.totalorder %s29, 1
      %p320 = por %p318, %p319
      %p321 = scmp.ne.s32.totalorder %s312, %s313
      %p322 = scmp.eq.s32.totalorder %s29, 0
      %p323 = por %p321, %p322
      %p324 = scmp.ne.s32.totalorder %s312, %s313
      %p325 = scmp.eq.s32.totalorder %s30, 1
      %p326 = por %p324, %p325
      %p328 = scmp.ne.s32.totalorder %s313, %s327
      %p329 = scmp.eq.s32.totalorder %s30, 0
      %p330 = por %p328, %p329
      %s331 = ssub.s32 %s24, %s31
      %p332 = scmp.eq.s32.totalorder %s331, 0
      %s334 = sadd.s32 %s333, 1
      %s335 = scalar_select %p332, %s333, %s334
      %p338 = pneg %p332
      %p339 = scmp.eq.s32.totalorder %s24, 1
      %p340 = por %p338, %p339
      %p341 = scmp.ne.s32.totalorder %s333, %s336
      %p342 = scmp.eq.s32.totalorder %s24, 0
      %p343 = por %p341, %p342
      %p344 = scmp.ne.s32.totalorder %s333, %s336
      %p345 = scmp.eq.s32.totalorder %s29, 1
      %p346 = por %p344, %p345
      %p347 = scmp.ne.s32.totalorder %s336, %s337
      %p348 = scmp.eq.s32.totalorder %s29, 0
      %p349 = por %p347, %p348
      %p350 = scmp.ne.s32.totalorder %s336, %s337
      %p351 = scmp.eq.s32.totalorder %s30, 1
      %p352 = por %p350, %p351
      %p354 = scmp.ne.s32.totalorder %s337, %s353
      %p355 = scmp.eq.s32.totalorder %s30, 0
      %p356 = por %p354, %p355
      %p357 = scmp.le.s32.totalorder 1, %s24
      %p358 = scmp.lt.s32.totalorder %s24, 3
      %p359 = pnand %p357, %p358
      %p360 = pneg %p359
      // Predicated region
      $region9: #{unet_forward.1} parent=5 // pred_check
        _
      $region10: #{unet_forward.1} parent=5 // pred_check_branch
        %362 = sbr.rel (%p359) target = $region12
      $region11: #{unet_forward.1} parent=5 // pred_region
        %s363 = ssub.s32 %s24, 1
        // Predicated region
        $region13: #{unet_forward.1} parent=11 // pred_check
          %p364 = pneg %p71
        $region14: #{unet_forward.1} parent=11 // pred_check_branch
          %366 = sbr.rel (%p364) target = $region16
        $region15: #{unet_forward.1} parent=11 // pred_region
          _
        $region16: #{unet_forward.1} parent=11 // pred_fallthru
          _
        // Predicated region
        $region17: #{unet_forward.1} parent=11 // pred_check
          %p367 = pneg %p92
        $region18: #{unet_forward.1} parent=11 // pred_check_branch
          %369 = sbr.rel (%p367) target = $region20
        $region19: #{unet_forward.1} parent=11 // pred_region
          _
        $region20: #{unet_forward.1} parent=11 // pred_fallthru
          _
        // Predicated region
        $region21: #{unet_forward.1} parent=11 // pred_check
          %p370 = pneg %p113
        $region22: #{unet_forward.1} parent=11 // pred_check_branch
          %372 = sbr.rel (%p370) target = $region24
        $region23: #{unet_forward.1} parent=11 // pred_region
          _
        $region24: #{unet_forward.1} parent=11 // pred_fallthru
          _
        // Predicated region
        $region25: #{unet_forward.1} parent=11 // pred_check
          %p373 = pneg %p134
        $region26: #{unet_forward.1} parent=11 // pred_check_branch
          %375 = sbr.rel (%p373) target = $region28
        $region27: #{unet_forward.1} parent=11 // pred_region
          _
        $region28: #{unet_forward.1} parent=11 // pred_fallthru
          _
        // Predicated region
        $region29: #{unet_forward.1} parent=11 // pred_check
          %p376 = pneg %p155
        $region30: #{unet_forward.1} parent=11 // pred_check_branch
          %378 = sbr.rel (%p376) target = $region32
        $region31: #{unet_forward.1} parent=11 // pred_region
          %s380 = ssub.s32 64, 64
          %381 = vsyncadd [#allocation4], %s380
          %s383 = sshll.u32 [#allocation3], 4
          %s384 = int_to_ptr.vmem [resolvable:$true] %s383
          %386 = dma.hbm_to_vmem [thread:$0]  %s5, 64, %s384, [#allocation4]
        $region32: #{unet_forward.1} parent=11 // pred_fallthru
          _
        // Predicated region
        $region33: #{unet_forward.1} parent=11 // pred_check
          %p387 = pneg %p176
        $region34: #{unet_forward.1} parent=11 // pred_check_branch
          %389 = sbr.rel (%p387) target = $region36
        $region35: #{unet_forward.1} parent=11 // pred_region
          _
        $region36: #{unet_forward.1} parent=11 // pred_fallthru
          _
        // Predicated region
        $region37: #{unet_forward.1} parent=11 // pred_check
          %p390 = pneg %p197
        $region38: #{unet_forward.1} parent=11 // pred_check_branch
          %392 = sbr.rel (%p390) target = $region40
        $region39: #{unet_forward.1} parent=11 // pred_region
          _
        $region40: #{unet_forward.1} parent=11 // pred_fallthru
          _
        // Predicated region
        $region41: #{unet_forward.1} parent=11 // pred_check
          %p393 = pneg %p218
        $region42: #{unet_forward.1} parent=11 // pred_check_branch
          %395 = sbr.rel (%p393) target = $region44
        $region43: #{unet_forward.1} parent=11 // pred_region
          _
        $region44: #{unet_forward.1} parent=11 // pred_fallthru
          _
        // Predicated region
        $region45: #{unet_forward.1} parent=11 // pred_check
          %p396 = pneg %p239
        $region46: #{unet_forward.1} parent=11 // pred_check_branch
          %398 = sbr.rel (%p396) target = $region48
        $region47: #{unet_forward.1} parent=11 // pred_region
          _
        $region48: #{unet_forward.1} parent=11 // pred_fallthru
          _
        // Predicated region
        $region49: #{unet_forward.1} parent=11 // pred_check
          %p399 = pneg %p260
        $region50: #{unet_forward.1} parent=11 // pred_check_branch
          %401 = sbr.rel (%p399) target = $region52
        $region51: #{unet_forward.1} parent=11 // pred_region
          %s403 = ssub.s32 64, 64
          %404 = vsyncadd [#allocation6], %s403
          %s406 = sshll.u32 [#allocation5], 4
          %s407 = int_to_ptr.vmem [resolvable:$true] %s406
          %409 = dma.hbm_to_vmem [thread:$0]  %s10, 64, %s407, [#allocation6]
        $region52: #{unet_forward.1} parent=11 // pred_fallthru
          _
        // Predicated region
        $region53: #{unet_forward.1} parent=11 // pred_check
          %p410 = pneg %p281
        $region54: #{unet_forward.1} parent=11 // pred_check_branch
          %412 = sbr.rel (%p410) target = $region56
        $region55: #{unet_forward.1} parent=11 // pred_region
          _
        $region56: #{unet_forward.1} parent=11 // pred_fallthru
          _
        // Predicated region
        $region57: #{unet_forward.1} parent=11 // pred_check
          %p413 = pneg %p302
        $region58: #{unet_forward.1} parent=11 // pred_check_branch
          %415 = sbr.rel (%p413) target = $region60
        $region59: #{unet_forward.1} parent=11 // pred_region
          %s417 = ssub.s32 16, 16
          %418 = vsyncadd [#allocation6], %s417
          %s420 = sshll.u32 [#allocation7], 4
          %s421 = int_to_ptr.vmem [resolvable:$true] %s420
          %423 = dma.hbm_to_vmem [thread:$0]  %s12, 16, %s421, [#allocation6]
        $region60: #{unet_forward.1} parent=11 // pred_fallthru
          _
        // Predicated region
        $region61: #{unet_forward.1} parent=11 // pred_check
          %p424 = pneg %p323
        $region62: #{unet_forward.1} parent=11 // pred_check_branch
          %426 = sbr.rel (%p424) target = $region64
        $region63: #{unet_forward.1} parent=11 // pred_region
          _
        $region64: #{unet_forward.1} parent=11 // pred_fallthru
          _
      $region12: #{unet_forward.1} parent=5 // pred_fallthru
        _
      %p427 = scmp.lt.s32.totalorder %s24, 2
      // Predicated region
      $region65: #{unet_forward.1} parent=5 // pred_check
        %p428 = pneg %p427
      $region66: #{unet_forward.1} parent=5 // pred_check_branch
        %430 = sbr.rel (%p428) target = $region68
      $region67: #{unet_forward.1} parent=5 // pred_region
        // Predicated region
        $region69: #{unet_forward.1} parent=67 // pred_check
          %p431 = pneg %p44
        $region70: #{unet_forward.1} parent=67 // pred_check_branch
          %433 = sbr.rel (%p431) target = $region72
        $region71: #{unet_forward.1} parent=67 // pred_region
          %p434 = scmp.lt.s32.totalorder %s24, 1
          %s435 = scalar_select %p434, %s24, 1
          %s436 = smul.addr %s435, 2
          %s437 = scalar_lea.vmem %s0, %s436
        $region72: #{unet_forward.1} parent=67 // pred_fallthru
          _
      $region68: #{unet_forward.1} parent=5 // pred_fallthru
        _
      %p438 = scmp.le.s32.totalorder 1, %s24
      %p439 = scmp.lt.s32.totalorder %s24, 3
      %p440 = pnand %p438, %p439
      %p441 = pneg %p440
      // Predicated region
      $region73: #{unet_forward.1} parent=5 // pred_check
        _
      $region74: #{unet_forward.1} parent=5 // pred_check_branch
        %443 = sbr.rel (%p440) target = $region76
      $region75: #{unet_forward.1} parent=5 // pred_region
        %s444 = ssub.s32 %s24, 1
        // Predicated region
        $region77: #{unet_forward.1} parent=75 // pred_check
          %p445 = pneg %p155
        $region78: #{unet_forward.1} parent=75 // pred_check_branch
          %447 = sbr.rel (%p445) target = $region80
        $region79: #{unet_forward.1} parent=75 // pred_region
          %448 = dma.done [#allocation4], 64
        $region80: #{unet_forward.1} parent=75 // pred_fallthru
          _
        // Predicated region
        $region81: #{unet_forward.1} parent=75 // pred_check
          %p449 = pneg %p260
        $region82: #{unet_forward.1} parent=75 // pred_check_branch
          %451 = sbr.rel (%p449) target = $region84
        $region83: #{unet_forward.1} parent=75 // pred_region
          %452 = dma.done [#allocation6], 64
        $region84: #{unet_forward.1} parent=75 // pred_fallthru
          _
        // Predicated region
        $region85: #{unet_forward.1} parent=75 // pred_check
          %p453 = pneg %p302
        $region86: #{unet_forward.1} parent=75 // pred_check_branch
          %455 = sbr.rel (%p453) target = $region88
        $region87: #{unet_forward.1} parent=75 // pred_region
          %456 = dma.done [#allocation6], 16
        $region88: #{unet_forward.1} parent=75 // pred_fallthru
          _
        %p457 = scmp.lt.s32.totalorder %s29, 1
        %s458 = scalar_select %p457, %s29, 1
        %s459 = smul.addr %s458, 2
        %s460 = scalar_lea.vmem %s0, %s459
        %p461 = pneg %p50
        %p462 = pneg %p47
        %p463 = pneg %p71
        %p464 = pneg %p68
        %p465 = pneg %p92
        %p466 = pneg %p89
        %p467 = pneg %p113
        %p468 = pneg %p110
        %p469 = pneg %p134
        %p470 = pneg %p131
        %p471 = pneg %p155
        %p472 = pneg %p152
        %p473 = pneg %p176
        %p474 = pneg %p173
        %p475 = pneg %p197
        %p476 = pneg %p194
        %p477 = pneg %p218
        %p478 = pneg %p215
        %p479 = pneg %p239
        %p480 = pneg %p236
        %p481 = pneg %p260
        %p482 = pneg %p257
        %p483 = pneg %p281
        %p484 = pneg %p278
        %p485 = pneg %p302
        %p486 = pneg %p299
        %p487 = pneg %p323
        %p488 = pneg %p320
        %p489 = pneg %p349
        %p490 = pneg %p346
        %p491 = scmp.lt.s32.totalorder %s29, 1
        %s492 = scalar_select %p491, %s29, 1
        %s493 = smul.addr %s492, 2
        %s494 = scalar_lea.vmem %s14, %s493
        %p495 = scmp.lt.s32.totalorder %s29, 1
        %s496 = scalar_select %p495, %s29, 1
        %s497 = smul.addr %s496, 2
        %s498 = scalar_lea.vmem %s0, %s497
        %p499 = scmp.lt.s32.totalorder %s29, 1
        %s500 = scalar_select %p499, %s29, 1
        %s501 = smul.addr %s500, 2
        %s502 = scalar_lea.vmem %s14, %s501
        %v504 = vld [vmem:[%s1] sm:$0xff]
        %v505 = vld [vmem:[%s1 + $0x8] sm:$0xff]
        %v506 = vld [vmem:[%s1 + $0x10] sm:$0x1]
        %v507 = vld [vmem:[%s1 + $0x18] sm:$0x1]
        %v508 = vld [vmem:[%s2] sm:$0xff]
        %v509 = vld [vmem:[%s2 + $0x8] sm:$0x1]
        %v510 = vld [vmem:[%s498] sm:$0x3]
        %v511 = vld [vmem:[#allocation3] sm:$0xf]
        %v513 = vlaneseq
        %v514 = vshrl.u32 %v513, 7
        %v515 = vsub.s32 0, %v514
        %v516 = vrot.slane %v510, %v515
        %v517 = vlaneseq
        %v518 = vshrl.u32 %v517, 7
        %v519 = vsub.s32 1, %v518
        %v520 = vrot.slane %v510, %v519
        %523 = vrot.lane.b32.xlu0 %v516, 17
        %v524 = vpop.permute.xlu0 %523
        %525 = vrot.lane.b32.xlu0 %v520, 17
        %v526 = vpop.permute.xlu0 %525
        %v527 = vlaneseq
        %v528 = vand.u32 %v527, 127
        %vm529 = vcmp.lt.s32.totalorder %v528, 17
        %v530 = vsel %vm529, %v524, %v526
        %v531 = vsel %vm529, %v526, %v524
        %v532 = vmul.f32 %v531, %v504
        %v533 = vmul.f32 %v530, %v505
        %534 = vrot.lane.b32.xlu0 %v516, 16
        %v535 = vpop.permute.xlu0 %534
        %536 = vrot.lane.b32.xlu0 %v520, 16
        %v537 = vpop.permute.xlu0 %536
        %vm538 = vcmp.lt.s32.totalorder %v528, 16
        %v539 = vsel %vm538, %v535, %v537
        %v540 = vsel %vm538, %v537, %v535
        %v543 = vrot.slane %v504, 1
        %v544 = vrot.slane %v505, 1
        %v547 = vmul.f32 %v540, %v543
        %v548 = vmul.f32 %v539, %v544
        %549 = vrot.lane.b32.xlu0 %v516, 15
        %v550 = vpop.permute.xlu0 %549
        %551 = vrot.lane.b32.xlu0 %v520, 15
        %v552 = vpop.permute.xlu0 %551
        %vm553 = vcmp.lt.s32.totalorder %v528, 15
        %v554 = vsel %vm553, %v550, %v552
        %v555 = vsel %vm553, %v552, %v550
        %v556 = vrot.slane %v504, 2
        %v557 = vrot.slane %v505, 2
        %v560 = vmul.f32 %v555, %v556
        %v561 = vmul.f32 %v554, %v557
        %562 = vrot.lane.b32.xlu0 %v516, 1
        %v563 = vpop.permute.xlu0 %562
        %564 = vrot.lane.b32.xlu0 %v520, 1
        %v565 = vpop.permute.xlu0 %564
        %vm566 = vcmp.lt.s32.totalorder %v528, 1
        %v567 = vsel %vm566, %v563, %v565
        %v568 = vsel %vm566, %v565, %v563
        %v569 = vrot.slane %v504, 3
        %v570 = vrot.slane %v505, 3
        %v573 = vmul.f32 %v568, %v569
        %v574 = vmul.f32 %v567, %v570
        %v575 = vcombine.high %v504, %v505
        %v577 = vunpack.c.l.s4 1966171168
        %v578 = vunpack.c.0.s8 %v577
        %v579 = vlaneseq
        %v580 = vshrl.u32 %v579, 7
        %v581 = vsub.s32 %v578, %v580
        %v582 = vrot.slane %v575, %v581
        %v584 = vunpack.c.l.s4 1966171168
        %v585 = vunpack.c.0.s8 %v584
        %v586 = vlaneseq
        %v587 = vshrl.u32 %v586, 7
        %v588 = vsub.s32 %v585, %v587
        %v589 = vrot.slane %v582, %v588
        %v591 = vmul.f32 %v510, %v589
        %592 = vrot.lane.b32.xlu0 %v516, 127
        %v593 = vpop.permute.xlu0 %592
        %594 = vrot.lane.b32.xlu0 %v520, 127
        %v595 = vpop.permute.xlu0 %594
        %vm596 = vcmp.lt.s32.totalorder %v528, 127
        %v597 = vsel %vm596, %v593, %v595
        %v598 = vsel %vm596, %v595, %v593
        %v599 = vrot.slane %v504, 5
        %v600 = vrot.slane %v505, 5
        %v603 = vmul.f32 %v597, %v599
        %v604 = vmul.f32 %v598, %v600
        %605 = vrot.lane.b32.xlu0 %v516, 113
        %v606 = vpop.permute.xlu0 %605
        %607 = vrot.lane.b32.xlu0 %v520, 113
        %v608 = vpop.permute.xlu0 %607
        %vm609 = vcmp.lt.s32.totalorder %v528, 113
        %v610 = vsel %vm609, %v606, %v608
        %v611 = vsel %vm609, %v608, %v606
        %v612 = vrot.slane %v504, 6
        %v613 = vrot.slane %v505, 6
        %v616 = vmul.f32 %v610, %v612
        %v617 = vmul.f32 %v611, %v613
        %618 = vrot.lane.b32.xlu0 %v516, 112
        %v619 = vpop.permute.xlu0 %618
        %620 = vrot.lane.b32.xlu0 %v520, 112
        %v621 = vpop.permute.xlu0 %620
        %vm622 = vcmp.lt.s32.totalorder %v528, 112
        %v623 = vsel %vm622, %v619, %v621
        %v624 = vsel %vm622, %v621, %v619
        %v625 = vrot.slane %v504, 7
        %v626 = vrot.slane %v505, 7
        %v629 = vmul.f32 %v623, %v625
        %v630 = vmul.f32 %v624, %v626
        %631 = vrot.lane.b32.xlu0 %v516, 111
        %v632 = vpop.permute.xlu0 %631
        %633 = vrot.lane.b32.xlu0 %v520, 111
        %v634 = vpop.permute.xlu0 %633
        %vm635 = vcmp.lt.s32.totalorder %v528, 111
        %v636 = vsel %vm635, %v632, %v634
        %v637 = vsel %vm635, %v634, %v632
        %v638 = vmul.f32 %v636, %v506
        %v639 = vmul.f32 %v637, %v507
        %v642 = vrot.slane %v547, 7
        %v643 = vrot.slane %v548, 7
        %v648 = vrot.slane %v560, 6
        %v649 = vrot.slane %v561, 6
        %v654 = vrot.slane %v573, 5
        %v655 = vrot.slane %v574, 5
        %v659 = vlaneseq
        %v660 = vshrl.u32 %v659, 7
        %v661 = vsub.s32 0, %v660
        %v662 = vrot.slane %v591, %v661
        %v663 = vlaneseq
        %v664 = vshrl.u32 %v663, 7
        %v665 = vsub.s32 1, %v664
        %v666 = vrot.slane %v591, %v665
        %v671 = vrot.slane %v603, 3
        %v672 = vrot.slane %v604, 3
        %v677 = vrot.slane %v616, 2
        %v678 = vrot.slane %v617, 2
        %v683 = vrot.slane %v629, 1
        %v684 = vrot.slane %v630, 1
        %vm687 = vcmask 1040384
        %v688 = vsel %vm687, %v532, %v642
        %v689 = vsel %vm687, %v533, %v643
        %vm690 = vcmask 1041408
        %v691 = vsel %vm690, %v688, %v648
        %v692 = vsel %vm690, %v689, %v649
        %vm693 = vcmask 1042432
        %v694 = vsel %vm693, %v691, %v654
        %v695 = vsel %vm693, %v692, %v655
        %vm696 = vcmask 1043456
        %v697 = vsel %vm696, %v694, %v662
        %v698 = vsel %vm696, %v695, %v666
        %vm699 = vcmask 1044480
        %v700 = vsel %vm699, %v697, %v671
        %v701 = vsel %vm699, %v698, %v672
        %vm702 = vcmask 1045504
        %v703 = vsel %vm702, %v700, %v677
        %v704 = vsel %vm702, %v701, %v678
        %vm705 = vcmask 1046528
        %v706 = vsel %vm705, %v703, %v683
        %v707 = vsel %vm705, %v704, %v684
        %v708 = vpack.c.bf16 %v638, %v706
        %v709 = vpack.c.bf16 %v639, %v707
        %v710 = vld [vmem:[%s6] sm:$0xff]
        %712 = vset.pattern.permute.xlu0 0
        %713 = vperm.xlu0 %712, %v710
        %v714 = vpop.permute.xlu0 %713
        %vm716 = vcmask 72704
        %v718 = vsel %vm716, %v511, 0
        %v720 = vsel %vm696, 4294967295, 65535
        %v721 = vsel %vm699, %v720, 0
        %v723 = vand.u32 %v708, %v721
        %v726 = vand.u32 %v709, %v721
        %728 = vmatprep.subr.bf16.mxu0 %v726
        %729 = vmatpush1.bf16.msra.mxu0 %v723
        %730 = vmatprep.subr.bf16.mxu0 0
        %731 = vmatpush1.bf16.msra.mxu0 0
        %732 = vmatprep.subr.bf16.mxu0 0
        %733 = vmatpush1.bf16.msra.mxu0 0
        %734 = vmatprep.subr.bf16.mxu0 0
        %735 = vmatpush1.bf16.msra.mxu0 0
        %736 = vmatprep.subr.bf16.mxu0 0
        %737 = vmatpush1.bf16.msra.mxu0 0
        %738 = vmatprep.subr.bf16.mxu0 0
        %739 = vmatpush1.bf16.msra.mxu0 0
        %740 = vmatprep.subr.bf16.mxu0 0
        %741 = vmatpush1.bf16.msra.mxu0 0
        %742 = vmatprep.subr.bf16.mxu0 0
        %743 = vmatpush1.bf16.msra.mxu0 0
        %744 = vmatprep.subr.bf16.mxu0 0
        %745 = vmatpush1.bf16.msra.mxu0 0
        %746 = vmatprep.subr.bf16.mxu0 0
        %747 = vmatpush1.bf16.msra.mxu0 0
        %748 = vmatprep.subr.bf16.mxu0 0
        %749 = vmatpush1.bf16.msra.mxu0 0
        %750 = vmatprep.subr.bf16.mxu0 0
        %751 = vmatpush1.bf16.msra.mxu0 0
        %752 = vmatprep.subr.bf16.mxu0 0
        %753 = vmatpush1.bf16.msra.mxu0 0
        %754 = vmatprep.subr.bf16.mxu0 0
        %755 = vmatpush1.bf16.msra.mxu0 0
        %756 = vmatprep.subr.bf16.mxu0 0
        %757 = vmatpush1.bf16.msra.mxu0 0
        %758 = vmatprep.subr.bf16.mxu0 0
        %759 = vmatpush1.bf16.msra.mxu0 0
        %760 = vmatprep.mubr.bf16.mxu0 0
        %761 = vmatmul.mubr.bf16.gmra.mrb[0].mxu0 %v718
        %v762 = vpop.f32.mrb[0].mxu0
        %v763 = vadd.f32 %v714, %v762
        %v764 = vpop.f32.mrb[0].mxu0
        %v765 = vadd.f32 %v714, %v764
        %v766 = vpop.f32.mrb[0].mxu0
        %v767 = vpop.f32.mrb[0].mxu0
        %768 = vdwg.mxu0
        %v769 = vmax.f32 %v763, 0.0
        %v770 = vmax.f32 %v765, 0.0
        %771 = vrot.lane.b32.xlu0 %v769, 127
        %v772 = vpop.permute.xlu0 %771
        %773 = vrot.lane.b32.xlu0 %v770, 127
        %v774 = vpop.permute.xlu0 %773
        %v775 = vsel %vm596, %v772, %v774
        %v776 = vsel %vm596, %v774, %v772
        %v777 = vmax.f32 %v769, %v775
        %v778 = vmax.f32 %v770, %v776
        %779 = vrot.lane.b32.xlu0 %v777, 112
        %v780 = vpop.permute.xlu0 %779
        %781 = vrot.lane.b32.xlu0 %v778, 112
        %v782 = vpop.permute.xlu0 %781
        %v783 = vsel %vm622, %v780, %v782
        %v784 = vsel %vm622, %v782, %v780
        %v785 = vmax.f32 %v777, %v783
        %v786 = vmax.f32 %v778, %v784
        %v787 = vpack.c.bf16 %v785, %v785
        %v788 = vpack.c.bf16 %v786, %v786
        %v789 = vld [vmem:[%s3] sm:$0xf]
        %v790 = vld [vmem:[%s3 + $0x4] sm:$0xf]
        %v791 = vld [vmem:[%s3 + $0x8] sm:$0xf]
        %v792 = vld [vmem:[%s3 + $0xc] sm:$0xf]
        %v793 = vld [vmem:[%s3 + $0x10] sm:$0xf]
        %v794 = vld [vmem:[%s3 + $0x14] sm:$0xf]
        %v795 = vld [vmem:[%s3 + $0x18] sm:$0xf]
        %v796 = vld [vmem:[%s3 + $0x1c] sm:$0xf]
        %v797 = vld [vmem:[%s3 + $0x20] sm:$0xf]
        %v798 = vld [vmem:[%s3 + $0x24] sm:$0xf]
        %v799 = vld [vmem:[%s3 + $0x28] sm:$0xf]
        %v800 = vld [vmem:[%s3 + $0x2c] sm:$0xf]
        %v801 = vld [vmem:[%s3 + $0x30] sm:$0xf]
        %v802 = vld [vmem:[%s3 + $0x34] sm:$0xf]
        %v803 = vld [vmem:[%s3 + $0x38] sm:$0xf]
        %v804 = vld [vmem:[%s3 + $0x3c] sm:$0xf]
        %v805 = vld [vmem:[%s3 + $0x40] sm:$0xf]
        %v806 = vld [vmem:[%s3 + $0x44] sm:$0xf]
        %v807 = vld [vmem:[%s3 + $0x48] sm:$0xf]
        %v808 = vld [vmem:[%s3 + $0x4c] sm:$0xf]
        %v809 = vld [vmem:[%s3 + $0x50] sm:$0xf]
        %v810 = vld [vmem:[%s3 + $0x54] sm:$0xf]
        %v811 = vld [vmem:[%s3 + $0x58] sm:$0xf]
        %v812 = vld [vmem:[%s3 + $0x5c] sm:$0xf]
        %v813 = vld [vmem:[%s3 + $0x60] sm:$0xf]
        %v814 = vld [vmem:[%s3 + $0x64] sm:$0xf]
        %v815 = vld [vmem:[%s3 + $0x68] sm:$0xf]
        %v816 = vld [vmem:[%s3 + $0x6c] sm:$0xf]
        %v817 = vld [vmem:[%s3 + $0x70] sm:$0xf]
        %v818 = vld [vmem:[%s3 + $0x74] sm:$0xf]
        %v819 = vld [vmem:[%s3 + $0x78] sm:$0xf]
        %v820 = vld [vmem:[%s3 + $0x7c] sm:$0xf]
        %v853 = vunpack.c.l.b16 %v789
        %v854 = vunpack.c.l.b16 %v790
        %v855 = vunpack.c.l.b16 %v791
        %v856 = vunpack.c.l.b16 %v792
        %v857 = vunpack.c.l.b16 %v793
        %v858 = vunpack.c.l.b16 %v794
        %v859 = vunpack.c.l.b16 %v795
        %v860 = vunpack.c.l.b16 %v796
        %v861 = vunpack.c.l.b16 %v797
        %v862 = vunpack.c.l.b16 %v798
        %v863 = vunpack.c.l.b16 %v799
        %v864 = vunpack.c.l.b16 %v800
        %v865 = vunpack.c.l.b16 %v801
        %v866 = vunpack.c.l.b16 %v802
        %v867 = vunpack.c.l.b16 %v803
        %v868 = vunpack.c.l.b16 %v804
        %v869 = vunpack.c.l.b16 %v805
        %v870 = vunpack.c.l.b16 %v806
        %v871 = vunpack.c.l.b16 %v807
        %v872 = vunpack.c.l.b16 %v808
        %v873 = vunpack.c.l.b16 %v809
        %v874 = vunpack.c.l.b16 %v810
        %v875 = vunpack.c.l.b16 %v811
        %v876 = vunpack.c.l.b16 %v812
        %v877 = vunpack.c.l.b16 %v813
        %v878 = vunpack.c.l.b16 %v814
        %v879 = vunpack.c.l.b16 %v815
        %v880 = vunpack.c.l.b16 %v816
        %v881 = vunpack.c.l.b16 %v817
        %v882 = vunpack.c.l.b16 %v818
        %v883 = vunpack.c.l.b16 %v819
        %v884 = vunpack.c.l.b16 %v820
        %v885 = vpack.c.b16 %v854, %v853
        %v886 = vpack.c.b16 %v856, %v855
        %v887 = vpack.c.b16 %v858, %v857
        %v888 = vpack.c.b16 %v860, %v859
        %v889 = vpack.c.b16 %v862, %v861
        %v890 = vpack.c.b16 %v864, %v863
        %v891 = vpack.c.b16 %v866, %v865
        %v892 = vpack.c.b16 %v868, %v867
        %v893 = vpack.c.b16 %v870, %v869
        %v894 = vpack.c.b16 %v872, %v871
        %v895 = vpack.c.b16 %v874, %v873
        %v896 = vpack.c.b16 %v876, %v875
        %v897 = vpack.c.b16 %v878, %v877
        %v898 = vpack.c.b16 %v880, %v879
        %v899 = vpack.c.b16 %v882, %v881
        %v900 = vpack.c.b16 %v884, %v883
        %917 = vmatprep.subr.bf16.mxu0 0
        %918 = vmatpush1.bf16.msra.mxu0 %v885
        %919 = vmatprep.subr.bf16.mxu0 0
        %920 = vmatpush1.bf16.msra.mxu0 %v886
        %921 = vmatprep.subr.bf16.mxu0 0
        %922 = vmatpush1.bf16.msra.mxu0 %v887
        %923 = vmatprep.subr.bf16.mxu0 0
        %924 = vmatpush1.bf16.msra.mxu0 %v888
        %925 = vmatprep.subr.bf16.mxu0 0
        %926 = vmatpush1.bf16.msra.mxu0 %v889
        %927 = vmatprep.subr.bf16.mxu0 0
        %928 = vmatpush1.bf16.msra.mxu0 %v890
        %929 = vmatprep.subr.bf16.mxu0 0
        %930 = vmatpush1.bf16.msra.mxu0 %v891
        %931 = vmatprep.subr.bf16.mxu0 0
        %932 = vmatpush1.bf16.msra.mxu0 %v892
        %933 = vmatprep.subr.bf16.mxu0 0
        %934 = vmatpush1.bf16.msra.mxu0 %v893
        %935 = vmatprep.subr.bf16.mxu0 0
        %936 = vmatpush1.bf16.msra.mxu0 %v894
        %937 = vmatprep.subr.bf16.mxu0 0
        %938 = vmatpush1.bf16.msra.mxu0 %v895
        %939 = vmatprep.subr.bf16.mxu0 0
        %940 = vmatpush1.bf16.msra.mxu0 %v896
        %941 = vmatprep.subr.bf16.mxu0 0
        %942 = vmatpush1.bf16.msra.mxu0 %v897
        %943 = vmatprep.subr.bf16.mxu0 0
        %944 = vmatpush1.bf16.msra.mxu0 %v898
        %945 = vmatprep.subr.bf16.mxu0 0
        %946 = vmatpush1.bf16.msra.mxu0 %v899
        %947 = vmatprep.subr.bf16.mxu0 0
        %948 = vmatpush1.bf16.msra.mxu0 %v900
        %949 = vmatprep.mubr.bf16.mxu0 %v788
        %950 = vmatmul.mubr.bf16.gmra.mrb[0].mxu0 %v787
        %v951 = vpop.f32.mrb[0].mxu0
        %v952 = vadd.f32 0.0, %v951
        %v953 = vpop.f32.mrb[0].mxu0
        %v954 = vpop.f32.mrb[0].mxu0
        %v955 = vpop.f32.mrb[0].mxu0
        %956 = vdwg.mxu0
        %v957 = vld [vmem:[%s7] sm:$0xf]
        %v958 = vld [vmem:[%s7 + $0x4] sm:$0xf]
        %960 = vrot.lane.b32.xlu0 %v952, 9
        %v961 = vpop.permute.xlu0 %960
        %v963 = vsel %vm716, 0.0, %v961
        %v964 = vlaneseq
        %v965 = vshrl.u32 %v964, 7
        %v966 = vsub.s32 0, %v965
        %v967 = vrot.slane %v508, %v966
        %v968 = vmul.f32 %v963, %v967
        %969 = vrot.lane.b32.xlu0 %v952, 8
        %v970 = vpop.permute.xlu0 %969
        %vm972 = vcmask 64512
        %v973 = vsel %vm972, 0.0, %v970
        %v974 = vlaneseq
        %v975 = vshrl.u32 %v974, 7
        %v976 = vsub.s32 1, %v975
        %v977 = vrot.slane %v508, %v976
        %v978 = vmul.f32 %v973, %v977
        %979 = vrot.lane.b32.xlu0 %v952, 7
        %v980 = vpop.permute.xlu0 %979
        %vm982 = vcmask 56320
        %v983 = vsel %vm982, 0.0, %v980
        %v984 = vlaneseq
        %v985 = vshrl.u32 %v984, 7
        %v986 = vsub.s32 2, %v985
        %v987 = vrot.slane %v508, %v986
        %v988 = vmul.f32 %v983, %v987
        %989 = vrot.lane.b32.xlu0 %v952, 1
        %v990 = vpop.permute.xlu0 %989
        %vm992 = vcmask 7168
        %v993 = vsel %vm992, 0.0, %v990
        %v994 = vlaneseq
        %v995 = vshrl.u32 %v994, 7
        %v996 = vsub.s32 3, %v995
        %v997 = vrot.slane %v508, %v996
        %v998 = vmul.f32 %v993, %v997
        %v999 = vlaneseq
        %v1000 = vshrl.u32 %v999, 7
        %v1001 = vsub.s32 4, %v1000
        %v1002 = vrot.slane %v508, %v1001
        %v1003 = vmul.f32 %v952, %v1002
        %1004 = vrot.lane.b32.xlu0 %v952, 127
        %v1005 = vpop.permute.xlu0 %1004
        %vm1007 = vcmask 515072
        %v1008 = vsel %vm1007, %v1005, 0.0
        %v1009 = vlaneseq
        %v1010 = vshrl.u32 %v1009, 7
        %v1011 = vsub.s32 5, %v1010
        %v1012 = vrot.slane %v508, %v1011
        %v1013 = vmul.f32 %v1008, %v1012
        %1014 = vrot.lane.b32.xlu0 %v952, 121
        %v1015 = vpop.permute.xlu0 %1014
        %vm1017 = vcmask 465920
        %v1018 = vsel %vm1017, %v1015, 0.0
        %v1019 = vlaneseq
        %v1020 = vshrl.u32 %v1019, 7
        %v1021 = vsub.s32 6, %v1020
        %v1022 = vrot.slane %v508, %v1021
        %v1023 = vmul.f32 %v1018, %v1022
        %1024 = vrot.lane.b32.xlu0 %v952, 120
        %v1025 = vpop.permute.xlu0 %1024
        %vm1027 = vcmask 457728
        %v1028 = vsel %vm1027, %v1025, 0.0
        %v1029 = vlaneseq
        %v1030 = vshrl.u32 %v1029, 7
        %v1031 = vsub.s32 7, %v1030
        %v1032 = vrot.slane %v508, %v1031
        %v1033 = vmul.f32 %v1028, %v1032
        %1034 = vrot.lane.b32.xlu0 %v952, 119
        %v1035 = vpop.permute.xlu0 %1034
        %vm1037 = vcmask 449536
        %v1038 = vsel %vm1037, %v1035, 0.0
        %v1039 = vlaneseq
        %v1040 = vshrl.u32 %v1039, 7
        %v1041 = vsub.s32 0, %v1040
        %v1042 = vrot.slane %v509, %v1041
        %v1043 = vmul.f32 %v1038, %v1042
        %v1044 = vpack.c.bf16 %v978, %v968
        %v1045 = vpack.c.bf16 %v998, %v988
        %v1046 = vpack.c.bf16 %v1013, %v1003
        %v1047 = vpack.c.bf16 %v1033, %v1023
        %v1048 = vpack.c.bf16 %v1043, %v1043
        %v1049 = vld [vmem:[%s8] sm:$0xff]
        %v1050 = vld [vmem:[%s8 + $0x8] sm:$0xff]
        %1052 = vset.pattern.permute.xlu0 0
        %1053 = vperm.xlu0 %1052, %v1049
        %v1054 = vpop.permute.xlu0 %1053
        %1057 = vset.pattern.permute.xlu0 0
        %1058 = vperm.xlu0 %1057, %v1050
        %v1059 = vpop.permute.xlu0 %1058
        %v1063 = vunpack.c.l.b16 %v957
        %v1064 = vunpack.c.l.b16 %v958
        %v1065 = vpack.c.b16 %v1064, %v1063
        %vm1066 = vcmask 588800
        %v1068 = vsel %vm1066, %v1065, 0
        %v1071 = vsel %vm696, %v1048, 0
        %1073 = vmatprep.subr.bf16.mxu0 0
        %1074 = vmatpush1.bf16.msra.mxu0 %v1044
        %1075 = vmatprep.subr.bf16.mxu0 0
        %1076 = vmatpush1.bf16.msra.mxu0 %v1045
        %1077 = vmatprep.subr.bf16.mxu0 0
        %1078 = vmatpush1.bf16.msra.mxu0 %v1046
        %1079 = vmatprep.subr.bf16.mxu0 0
        %1080 = vmatpush1.bf16.msra.mxu0 %v1047
        %1081 = vmatprep.subr.bf16.mxu0 0
        %1082 = vmatpush1.bf16.msra.mxu0 %v1071
        %1083 = vmatprep.subr.bf16.mxu0 0
        %1084 = vmatpush1.bf16.msra.mxu0 0
        %1085 = vmatprep.subr.bf16.mxu0 0
        %1086 = vmatpush1.bf16.msra.mxu0 0
        %1087 = vmatprep.subr.bf16.mxu0 0
        %1088 = vmatpush1.bf16.msra.mxu0 0
        %1089 = vmatprep.subr.bf16.mxu0 0
        %1090 = vmatpush1.bf16.msra.mxu0 0
        %1091 = vmatprep.subr.bf16.mxu0 0
        %1092 = vmatpush1.bf16.msra.mxu0 0
        %1093 = vmatprep.subr.bf16.mxu0 0
        %1094 = vmatpush1.bf16.msra.mxu0 0
        %1095 = vmatprep.subr.bf16.mxu0 0
        %1096 = vmatpush1.bf16.msra.mxu0 0
        %1097 = vmatprep.subr.bf16.mxu0 0
        %1098 = vmatpush1.bf16.msra.mxu0 0
        %1099 = vmatprep.subr.bf16.mxu0 0
        %1100 = vmatpush1.bf16.msra.mxu0 0
        %1101 = vmatprep.subr.bf16.mxu0 0
        %1102 = vmatpush1.bf16.msra.mxu0 0
        %1103 = vmatprep.subr.bf16.mxu0 0
        %1104 = vmatpush1.bf16.msra.mxu0 0
        %1105 = vmatprep.mubr.bf16.mxu0 0
        %1106 = vmatmul.mubr.bf16.gmra.mrb[0].mxu0 %v1068
        %v1107 = vpop.f32.mrb[0].mxu0
        %v1108 = vadd.f32 %v1054, %v1107
        %v1109 = vpop.f32.mrb[0].mxu0
        %v1110 = vpop.f32.mrb[0].mxu0
        %v1111 = vadd.f32 %v1059, %v1110
        %v1112 = vpop.f32.mrb[0].mxu0
        %1113 = vdwg.mxu0
        %v1114 = vmax.f32 %v1108, 0.0
        %v1115 = vmax.f32 %v1111, 0.0
        %v1116 = vpack.c.bf16 %v1115, %v1114
        %v1117 = vld [vmem:[%s4] sm:$0xff]
        %v1118 = vld [vmem:[%s4 + $0x8] sm:$0xff]
        %v1119 = vld [vmem:[%s4 + $0x10] sm:$0xff]
        %v1120 = vld [vmem:[%s4 + $0x18] sm:$0xff]
        %v1121 = vld [vmem:[%s4 + $0x20] sm:$0xff]
        %v1122 = vld [vmem:[%s4 + $0x28] sm:$0xff]
        %v1123 = vld [vmem:[%s4 + $0x30] sm:$0xff]
        %v1124 = vld [vmem:[%s4 + $0x38] sm:$0xff]
        %v1133 = vunpack.c.l.b16 %v1117
        %v1134 = vunpack.c.h.b16 %v1117
        %v1135 = vunpack.c.l.b16 %v1118
        %v1136 = vunpack.c.h.b16 %v1118
        %v1137 = vunpack.c.l.b16 %v1119
        %v1138 = vunpack.c.h.b16 %v1119
        %v1139 = vunpack.c.l.b16 %v1120
        %v1140 = vunpack.c.h.b16 %v1120
        %v1141 = vunpack.c.l.b16 %v1121
        %v1142 = vunpack.c.h.b16 %v1121
        %v1143 = vunpack.c.l.b16 %v1122
        %v1144 = vunpack.c.h.b16 %v1122
        %v1145 = vunpack.c.l.b16 %v1123
        %v1146 = vunpack.c.h.b16 %v1123
        %v1147 = vunpack.c.l.b16 %v1124
        %v1148 = vunpack.c.h.b16 %v1124
        %v1149 = vpack.c.b16 %v1135, %v1133
        %v1150 = vpack.c.b16 %v1136, %v1134
        %v1151 = vpack.c.b16 %v1139, %v1137
        %v1152 = vpack.c.b16 %v1140, %v1138
        %v1153 = vpack.c.b16 %v1143, %v1141
        %v1154 = vpack.c.b16 %v1144, %v1142
        %v1155 = vpack.c.b16 %v1147, %v1145
        %v1156 = vpack.c.b16 %v1148, %v1146
        %vm1165 = vcmask 523264
        %v1167 = vsel %vm1165, %v1116, 0
        %1169 = vmatprep.subr.bf16.mxu0 %v1150
        %1170 = vmatpush1.bf16.msra.mxu0 %v1149
        %1171 = vmatprep.subr.bf16.mxu0 %v1152
        %1172 = vmatpush1.bf16.msra.mxu0 %v1151
        %1173 = vmatprep.subr.bf16.mxu0 %v1154
        %1174 = vmatpush1.bf16.msra.mxu0 %v1153
        %1175 = vmatprep.subr.bf16.mxu0 %v1156
        %1176 = vmatpush1.bf16.msra.mxu0 %v1155
        %1177 = vmatprep.subr.bf16.mxu0 0
        %1178 = vmatpush1.bf16.msra.mxu0 0
        %1179 = vmatprep.subr.bf16.mxu0 0
        %1180 = vmatpush1.bf16.msra.mxu0 0
        %1181 = vmatprep.subr.bf16.mxu0 0
        %1182 = vmatpush1.bf16.msra.mxu0 0
        %1183 = vmatprep.subr.bf16.mxu0 0
        %1184 = vmatpush1.bf16.msra.mxu0 0
        %1185 = vmatprep.subr.bf16.mxu0 0
        %1186 = vmatpush1.bf16.msra.mxu0 0
        %1187 = vmatprep.subr.bf16.mxu0 0
        %1188 = vmatpush1.bf16.msra.mxu0 0
        %1189 = vmatprep.subr.bf16.mxu0 0
        %1190 = vmatpush1.bf16.msra.mxu0 0
        %1191 = vmatprep.subr.bf16.mxu0 0
        %1192 = vmatpush1.bf16.msra.mxu0 0
        %1193 = vmatprep.subr.bf16.mxu0 0
        %1194 = vmatpush1.bf16.msra.mxu0 0
        %1195 = vmatprep.subr.bf16.mxu0 0
        %1196 = vmatpush1.bf16.msra.mxu0 0
        %1197 = vmatprep.subr.bf16.mxu0 0
        %1198 = vmatpush1.bf16.msra.mxu0 0
        %1199 = vmatprep.subr.bf16.mxu0 0
        %1200 = vmatpush1.bf16.msra.mxu0 0
        %1201 = vmatprep.mubr.bf16.mxu0 0
        %1202 = vmatmul.mubr.bf16.gmra.mrb[0].mxu0 %v1167
        %v1203 = vpop.f32.mrb[0].mxu0
        %v1204 = vadd.f32 0.0, %v1203
        %v1205 = vpop.f32.mrb[0].mxu0
        %v1206 = vadd.f32 0.0, %v1205
        %v1207 = vpop.f32.mrb[0].mxu0
        %v1208 = vadd.f32 0.0, %v1207
        %v1209 = vpop.f32.mrb[0].mxu0
        %v1210 = vadd.f32 0.0, %v1209
        %1211 = vdwg.mxu0
        %v1212 = vld [vmem:[%s9] sm:$0xff]
        %1213 = vrot.lane.b32.xlu0 %v1204, 17
        %v1214 = vpop.permute.xlu0 %1213
        %1215 = vrot.lane.b32.xlu0 %v1208, 17
        %v1216 = vpop.permute.xlu0 %1215
        %1217 = vrot.lane.b32.xlu0 %v1206, 17
        %v1218 = vpop.permute.xlu0 %1217
        %1219 = vrot.lane.b32.xlu0 %v1210, 17
        %v1220 = vpop.permute.xlu0 %1219
        %v1221 = vsel %vm529, %v1214, %v1218
        %v1222 = vsel %vm529, %v1216, %v1220
        %v1223 = vsel %vm529, %v1218, %v1214
        %v1224 = vsel %vm529, %v1220, %v1216
        %v1225 = vlaneseq
        %v1226 = vshrl.u32 %v1225, 7
        %v1227 = vsub.s32 0, %v1226
        %v1228 = vrot.slane %v504, %v1227
        %v1229 = vlaneseq
        %v1230 = vshrl.u32 %v1229, 7
        %v1231 = vsub.s32 0, %v1230
        %v1232 = vrot.slane %v505, %v1231
        %v1233 = vmul.f32 %v1223, %v1228
        %v1234 = vmul.f32 %v1221, %v1232
        %v1235 = vmul.f32 %v1224, %v1228
        %v1236 = vmul.f32 %v1222, %v1232
        %1237 = vrot.lane.b32.xlu0 %v1204, 16
        %v1238 = vpop.permute.xlu0 %1237
        %1239 = vrot.lane.b32.xlu0 %v1208, 16
        %v1240 = vpop.permute.xlu0 %1239
        %1241 = vrot.lane.b32.xlu0 %v1206, 16
        %v1242 = vpop.permute.xlu0 %1241
        %1243 = vrot.lane.b32.xlu0 %v1210, 16
        %v1244 = vpop.permute.xlu0 %1243
        %v1245 = vsel %vm538, %v1238, %v1242
        %v1246 = vsel %vm538, %v1240, %v1244
        %v1247 = vsel %vm538, %v1242, %v1238
        %v1248 = vsel %vm538, %v1244, %v1240
        %v1249 = vlaneseq
        %v1250 = vshrl.u32 %v1249, 7
        %v1251 = vsub.s32 1, %v1250
        %v1252 = vrot.slane %v504, %v1251
        %v1253 = vlaneseq
        %v1254 = vshrl.u32 %v1253, 7
        %v1255 = vsub.s32 1, %v1254
        %v1256 = vrot.slane %v505, %v1255
        %v1257 = vmul.f32 %v1247, %v1252
        %v1258 = vmul.f32 %v1245, %v1256
        %v1259 = vmul.f32 %v1248, %v1252
        %v1260 = vmul.f32 %v1246, %v1256
        %1261 = vrot.lane.b32.xlu0 %v1204, 15
        %v1262 = vpop.permute.xlu0 %1261
        %1263 = vrot.lane.b32.xlu0 %v1208, 15
        %v1264 = vpop.permute.xlu0 %1263
        %1265 = vrot.lane.b32.xlu0 %v1206, 15
        %v1266 = vpop.permute.xlu0 %1265
        %1267 = vrot.lane.b32.xlu0 %v1210, 15
        %v1268 = vpop.permute.xlu0 %1267
        %v1269 = vsel %vm553, %v1262, %v1266
        %v1270 = vsel %vm553, %v1264, %v1268
        %v1271 = vsel %vm553, %v1266, %v1262
        %v1272 = vsel %vm553, %v1268, %v1264
        %v1273 = vlaneseq
        %v1274 = vshrl.u32 %v1273, 7
        %v1275 = vsub.s32 2, %v1274
        %v1276 = vrot.slane %v504, %v1275
        %v1277 = vlaneseq
        %v1278 = vshrl.u32 %v1277, 7
        %v1279 = vsub.s32 2, %v1278
        %v1280 = vrot.slane %v505, %v1279
        %v1281 = vmul.f32 %v1271, %v1276
        %v1282 = vmul.f32 %v1269, %v1280
        %v1283 = vmul.f32 %v1272, %v1276
        %v1284 = vmul.f32 %v1270, %v1280
        %1285 = vrot.lane.b32.xlu0 %v1204, 1
        %v1286 = vpop.permute.xlu0 %1285
        %1287 = vrot.lane.b32.xlu0 %v1208, 1
        %v1288 = vpop.permute.xlu0 %1287
        %1289 = vrot.lane.b32.xlu0 %v1206, 1
        %v1290 = vpop.permute.xlu0 %1289
        %1291 = vrot.lane.b32.xlu0 %v1210, 1
        %v1292 = vpop.permute.xlu0 %1291
        %v1293 = vsel %vm566, %v1286, %v1290
        %v1294 = vsel %vm566, %v1288, %v1292
        %v1295 = vsel %vm566, %v1290, %v1286
        %v1296 = vsel %vm566, %v1292, %v1288
        %v1297 = vlaneseq
        %v1298 = vshrl.u32 %v1297, 7
        %v1299 = vsub.s32 3, %v1298
        %v1300 = vrot.slane %v504, %v1299
        %v1301 = vlaneseq
        %v1302 = vshrl.u32 %v1301, 7
        %v1303 = vsub.s32 3, %v1302
        %v1304 = vrot.slane %v505, %v1303
        %v1305 = vmul.f32 %v1295, %v1300
        %v1306 = vmul.f32 %v1293, %v1304
        %v1307 = vmul.f32 %v1296, %v1300
        %v1308 = vmul.f32 %v1294, %v1304
        %v1309 = vlaneseq
        %v1310 = vshrl.u32 %v1309, 7
        %v1311 = vsub.s32 4, %v1310
        %v1312 = vrot.slane %v504, %v1311
        %v1313 = vlaneseq
        %v1314 = vshrl.u32 %v1313, 7
        %v1315 = vsub.s32 4, %v1314
        %v1316 = vrot.slane %v505, %v1315
        %v1317 = vmul.f32 %v1204, %v1312
        %v1318 = vmul.f32 %v1206, %v1316
        %v1319 = vmul.f32 %v1208, %v1312
        %v1320 = vmul.f32 %v1210, %v1316
        %1321 = vrot.lane.b32.xlu0 %v1204, 127
        %v1322 = vpop.permute.xlu0 %1321
        %1323 = vrot.lane.b32.xlu0 %v1208, 127
        %v1324 = vpop.permute.xlu0 %1323
        %1325 = vrot.lane.b32.xlu0 %v1206, 127
        %v1326 = vpop.permute.xlu0 %1325
        %1327 = vrot.lane.b32.xlu0 %v1210, 127
        %v1328 = vpop.permute.xlu0 %1327
        %v1329 = vsel %vm596, %v1322, %v1326
        %v1330 = vsel %vm596, %v1324, %v1328
        %v1331 = vsel %vm596, %v1326, %v1322
        %v1332 = vsel %vm596, %v1328, %v1324
        %v1333 = vlaneseq
        %v1334 = vshrl.u32 %v1333, 7
        %v1335 = vsub.s32 5, %v1334
        %v1336 = vrot.slane %v504, %v1335
        %v1337 = vlaneseq
        %v1338 = vshrl.u32 %v1337, 7
        %v1339 = vsub.s32 5, %v1338
        %v1340 = vrot.slane %v505, %v1339
        %v1341 = vmul.f32 %v1329, %v1336
        %v1342 = vmul.f32 %v1331, %v1340
        %v1343 = vmul.f32 %v1330, %v1336
        %v1344 = vmul.f32 %v1332, %v1340
        %1345 = vrot.lane.b32.xlu0 %v1204, 113
        %v1346 = vpop.permute.xlu0 %1345
        %1347 = vrot.lane.b32.xlu0 %v1208, 113
        %v1348 = vpop.permute.xlu0 %1347
        %1349 = vrot.lane.b32.xlu0 %v1206, 113
        %v1350 = vpop.permute.xlu0 %1349
        %1351 = vrot.lane.b32.xlu0 %v1210, 113
        %v1352 = vpop.permute.xlu0 %1351
        %v1353 = vsel %vm609, %v1346, %v1350
        %v1354 = vsel %vm609, %v1348, %v1352
        %v1355 = vsel %vm609, %v1350, %v1346
        %v1356 = vsel %vm609, %v1352, %v1348
        %v1357 = vlaneseq
        %v1358 = vshrl.u32 %v1357, 7
        %v1359 = vsub.s32 6, %v1358
        %v1360 = vrot.slane %v504, %v1359
        %v1361 = vlaneseq
        %v1362 = vshrl.u32 %v1361, 7
        %v1363 = vsub.s32 6, %v1362
        %v1364 = vrot.slane %v505, %v1363
        %v1365 = vmul.f32 %v1353, %v1360
        %v1366 = vmul.f32 %v1355, %v1364
        %v1367 = vmul.f32 %v1354, %v1360
        %v1368 = vmul.f32 %v1356, %v1364
        %1369 = vrot.lane.b32.xlu0 %v1204, 112
        %v1370 = vpop.permute.xlu0 %1369
        %1371 = vrot.lane.b32.xlu0 %v1208, 112
        %v1372 = vpop.permute.xlu0 %1371
        %1373 = vrot.lane.b32.xlu0 %v1206, 112
        %v1374 = vpop.permute.xlu0 %1373
        %1375 = vrot.lane.b32.xlu0 %v1210, 112
        %v1376 = vpop.permute.xlu0 %1375
        %v1377 = vsel %vm622, %v1370, %v1374
        %v1378 = vsel %vm622, %v1372, %v1376
        %v1379 = vsel %vm622, %v1374, %v1370
        %v1380 = vsel %vm622, %v1376, %v1372
        %v1381 = vlaneseq
        %v1382 = vshrl.u32 %v1381, 7
        %v1383 = vsub.s32 7, %v1382
        %v1384 = vrot.slane %v504, %v1383
        %v1385 = vlaneseq
        %v1386 = vshrl.u32 %v1385, 7
        %v1387 = vsub.s32 7, %v1386
        %v1388 = vrot.slane %v505, %v1387
        %v1389 = vmul.f32 %v1377, %v1384
        %v1390 = vmul.f32 %v1379, %v1388
        %v1391 = vmul.f32 %v1378, %v1384
        %v1392 = vmul.f32 %v1380, %v1388
        %1393 = vrot.lane.b32.xlu0 %v1204, 111
        %v1394 = vpop.permute.xlu0 %1393
        %1395 = vrot.lane.b32.xlu0 %v1208, 111
        %v1396 = vpop.permute.xlu0 %1395
        %1397 = vrot.lane.b32.xlu0 %v1206, 111
        %v1398 = vpop.permute.xlu0 %1397
        %1399 = vrot.lane.b32.xlu0 %v1210, 111
        %v1400 = vpop.permute.xlu0 %1399
        %v1401 = vsel %vm635, %v1394, %v1398
        %v1402 = vsel %vm635, %v1396, %v1400
        %v1403 = vsel %vm635, %v1398, %v1394
        %v1404 = vsel %vm635, %v1400, %v1396
        %v1405 = vlaneseq
        %v1406 = vshrl.u32 %v1405, 7
        %v1407 = vsub.s32 0, %v1406
        %v1408 = vrot.slane %v506, %v1407
        %v1409 = vlaneseq
        %v1410 = vshrl.u32 %v1409, 7
        %v1411 = vsub.s32 0, %v1410
        %v1412 = vrot.slane %v507, %v1411
        %v1413 = vmul.f32 %v1401, %v1408
        %v1414 = vmul.f32 %v1403, %v1412
        %v1415 = vmul.f32 %v1402, %v1408
        %v1416 = vmul.f32 %v1404, %v1412
        %v1417 = vpack.c.bf16 %v1235, %v1233
        %v1418 = vpack.c.bf16 %v1236, %v1234
        %v1419 = vpack.c.bf16 %v1259, %v1257
        %v1420 = vpack.c.bf16 %v1260, %v1258
        %v1421 = vpack.c.bf16 %v1283, %v1281
        %v1422 = vpack.c.bf16 %v1284, %v1282
        %v1423 = vpack.c.bf16 %v1307, %v1305
        %v1424 = vpack.c.bf16 %v1308, %v1306
        %v1425 = vpack.c.bf16 %v1319, %v1317
        %v1426 = vpack.c.bf16 %v1320, %v1318
        %v1427 = vpack.c.bf16 %v1343, %v1341
        %v1428 = vpack.c.bf16 %v1344, %v1342
        %v1429 = vpack.c.bf16 %v1367, %v1365
        %v1430 = vpack.c.bf16 %v1368, %v1366
        %v1431 = vpack.c.bf16 %v1391, %v1389
        %v1432 = vpack.c.bf16 %v1392, %v1390
        %v1433 = vpack.c.bf16 %v1415, %v1413
        %v1434 = vpack.c.bf16 %v1416, %v1414
        %v1435 = vld [vmem:[#allocation5] sm:$0xf]
        %1436 = vrot.lane.b32.xlu0 %v769, 17
        %v1437 = vpop.permute.xlu0 %1436
        %1438 = vrot.lane.b32.xlu0 %v770, 17
        %v1439 = vpop.permute.xlu0 %1438
        %v1440 = vsel %vm529, %v1437, %v1439
        %v1441 = vsel %vm529, %v1439, %v1437
        %v1442 = vmul.f32 %v1441, %v1228
        %v1443 = vmul.f32 %v1440, %v1232
        %1444 = vrot.lane.b32.xlu0 %v769, 16
        %v1445 = vpop.permute.xlu0 %1444
        %1446 = vrot.lane.b32.xlu0 %v770, 16
        %v1447 = vpop.permute.xlu0 %1446
        %v1448 = vsel %vm538, %v1445, %v1447
        %v1449 = vsel %vm538, %v1447, %v1445
        %v1450 = vmul.f32 %v1449, %v1252
        %v1451 = vmul.f32 %v1448, %v1256
        %1452 = vrot.lane.b32.xlu0 %v769, 15
        %v1453 = vpop.permute.xlu0 %1452
        %1454 = vrot.lane.b32.xlu0 %v770, 15
        %v1455 = vpop.permute.xlu0 %1454
        %v1456 = vsel %vm553, %v1453, %v1455
        %v1457 = vsel %vm553, %v1455, %v1453
        %v1458 = vmul.f32 %v1457, %v1276
        %v1459 = vmul.f32 %v1456, %v1280
        %1460 = vrot.lane.b32.xlu0 %v769, 1
        %v1461 = vpop.permute.xlu0 %1460
        %1462 = vrot.lane.b32.xlu0 %v770, 1
        %v1463 = vpop.permute.xlu0 %1462
        %v1464 = vsel %vm566, %v1461, %v1463
        %v1465 = vsel %vm566, %v1463, %v1461
        %v1466 = vmul.f32 %v1465, %v1300
        %v1467 = vmul.f32 %v1464, %v1304
        %v1468 = vmul.f32 %v769, %v1312
        %v1469 = vmul.f32 %v770, %v1316
        %v1470 = vmul.f32 %v775, %v1336
        %v1471 = vmul.f32 %v776, %v1340
        %1472 = vrot.lane.b32.xlu0 %v769, 113
        %v1473 = vpop.permute.xlu0 %1472
        %1474 = vrot.lane.b32.xlu0 %v770, 113
        %v1475 = vpop.permute.xlu0 %1474
        %v1476 = vsel %vm609, %v1473, %v1475
        %v1477 = vsel %vm609, %v1475, %v1473
        %v1478 = vmul.f32 %v1476, %v1360
        %v1479 = vmul.f32 %v1477, %v1364
        %1480 = vrot.lane.b32.xlu0 %v769, 112
        %v1481 = vpop.permute.xlu0 %1480
        %1482 = vrot.lane.b32.xlu0 %v770, 112
        %v1483 = vpop.permute.xlu0 %1482
        %v1484 = vsel %vm622, %v1481, %v1483
        %v1485 = vsel %vm622, %v1483, %v1481
        %v1486 = vmul.f32 %v1484, %v1384
        %v1487 = vmul.f32 %v1485, %v1388
        %1488 = vrot.lane.b32.xlu0 %v769, 111
        %v1489 = vpop.permute.xlu0 %1488
        %1490 = vrot.lane.b32.xlu0 %v770, 111
        %v1491 = vpop.permute.xlu0 %1490
        %v1492 = vsel %vm635, %v1489, %v1491
        %v1493 = vsel %vm635, %v1491, %v1489
        %v1494 = vmul.f32 %v1492, %v1408
        %v1495 = vmul.f32 %v1493, %v1412
        %v1496 = vpack.c.bf16 %v1450, %v1442
        %v1497 = vpack.c.bf16 %v1451, %v1443
        %v1498 = vpack.c.bf16 %v1466, %v1458
        %v1499 = vpack.c.bf16 %v1467, %v1459
        %v1500 = vpack.c.bf16 %v1470, %v1468
        %v1501 = vpack.c.bf16 %v1471, %v1469
        %v1502 = vpack.c.bf16 %v1486, %v1478
        %v1503 = vpack.c.bf16 %v1487, %v1479
        %v1504 = vpack.c.bf16 %v1494, %v1494
        %v1505 = vpack.c.bf16 %v1495, %v1495
        %v1507 = vsel %vm1066, %v1435, 0
        %v1510 = vsel %vm696, %v1504, 0
        %v1513 = vsel %vm696, %v1505, 0
        %1515 = vmatprep.subr.bf16.mxu0 %v1497
        %1516 = vmatpush1.bf16.msra.mxu0 %v1496
        %1517 = vmatprep.subr.bf16.mxu0 %v1499
        %1518 = vmatpush1.bf16.msra.mxu0 %v1498
        %1519 = vmatprep.subr.bf16.mxu0 %v1501
        %1520 = vmatpush1.bf16.msra.mxu0 %v1500
        %1521 = vmatprep.subr.bf16.mxu0 %v1503
        %1522 = vmatpush1.bf16.msra.mxu0 %v1502
        %1523 = vmatprep.subr.bf16.mxu0 %v1513
        %1524 = vmatpush1.bf16.msra.mxu0 %v1510
        %1525 = vmatprep.subr.bf16.mxu0 0
        %1526 = vmatpush1.bf16.msra.mxu0 0
        %1527 = vmatprep.subr.bf16.mxu0 0
        %1528 = vmatpush1.bf16.msra.mxu0 0
        %1529 = vmatprep.subr.bf16.mxu0 0
        %1530 = vmatpush1.bf16.msra.mxu0 0
        %1531 = vmatprep.subr.bf16.mxu0 0
        %1532 = vmatpush1.bf16.msra.mxu0 0
        %1533 = vmatprep.subr.bf16.mxu0 0
        %1534 = vmatpush1.bf16.msra.mxu0 0
        %1535 = vmatprep.subr.bf16.mxu0 0
        %1536 = vmatpush1.bf16.msra.mxu0 0
        %1537 = vmatprep.subr.bf16.mxu0 0
        %1538 = vmatpush1.bf16.msra.mxu0 0
        %1539 = vmatprep.subr.bf16.mxu0 0
        %1540 = vmatpush1.bf16.msra.mxu0 0
        %1541 = vmatprep.subr.bf16.mxu0 0
        %1542 = vmatpush1.bf16.msra.mxu0 0
        %1543 = vmatprep.subr.bf16.mxu0 0
        %1544 = vmatpush1.bf16.msra.mxu0 0
        %1545 = vmatprep.subr.bf16.mxu0 0
        %1546 = vmatpush1.bf16.msra.mxu0 0
        %1547 = vmatprep.mubr.bf16.mxu0 0
        %1548 = vmatmul.mubr.bf16.gmra.mrb[0].mxu0 %v1507
        %v1549 = vpop.f32.mrb[0].mxu0
        %v1550 = vadd.f32 0.0, %v1549
        %v1551 = vpop.f32.mrb[0].mxu0
        %v1552 = vadd.f32 0.0, %v1551
        %v1553 = vpop.f32.mrb[0].mxu0
        %v1554 = vpop.f32.mrb[0].mxu0
        %1555 = vdwg.mxu0
        %v1557 = vunpack.c.l.b16 %v1212
        %v1558 = vunpack.c.h.b16 %v1212
        %v1559 = vpack.c.b16 %v1557, %v1557
        %v1560 = vpack.c.b16 %v1558, %v1558
        %vm1562 = vcmask 130048
        %v1564 = vsel %vm1562, %v1560, 0
        %1566 = vmatprep.subr.bf16.mxu0 %v1418
        %1567 = vmatpush1.bf16.msra.mxu0 %v1417
        %1568 = vmatprep.subr.bf16.mxu0 %v1420
        %1569 = vmatpush1.bf16.msra.mxu0 %v1419
        %1570 = vmatprep.subr.bf16.mxu0 %v1422
        %1571 = vmatpush1.bf16.msra.mxu0 %v1421
        %1572 = vmatprep.subr.bf16.mxu0 %v1424
        %1573 = vmatpush1.bf16.msra.mxu0 %v1423
        %1574 = vmatprep.subr.bf16.mxu0 %v1426
        %1575 = vmatpush1.bf16.msra.mxu0 %v1425
        %1576 = vmatprep.subr.bf16.mxu0 %v1428
        %1577 = vmatpush1.bf16.msra.mxu0 %v1427
        %1578 = vmatprep.subr.bf16.mxu0 %v1430
        %1579 = vmatpush1.bf16.msra.mxu0 %v1429
        %1580 = vmatprep.subr.bf16.mxu0 %v1432
        %1581 = vmatpush1.bf16.msra.mxu0 %v1431
        %1582 = vmatprep.subr.bf16.mxu0 %v1434
        %1583 = vmatpush1.bf16.msra.mxu0 %v1433
        %1584 = vmatprep.subr.bf16.mxu0 0
        %1585 = vmatpush1.bf16.msra.mxu0 0
        %1586 = vmatprep.subr.bf16.mxu0 0
        %1587 = vmatpush1.bf16.msra.mxu0 0
        %1588 = vmatprep.subr.bf16.mxu0 0
        %1589 = vmatpush1.bf16.msra.mxu0 0
        %1590 = vmatprep.subr.bf16.mxu0 0
        %1591 = vmatpush1.bf16.msra.mxu0 0
        %1592 = vmatprep.subr.bf16.mxu0 0
        %1593 = vmatpush1.bf16.msra.mxu0 0
        %1594 = vmatprep.subr.bf16.mxu0 0
        %1595 = vmatpush1.bf16.msra.mxu0 0
        %1596 = vmatprep.subr.bf16.mxu0 0
        %1597 = vmatpush1.bf16.msra.mxu0 0
        %1598 = vmatprep.mubr.bf16.mxu0 %v1564
        %1599 = vmatmul.mubr.bf16.gmra.mrb[0].mxu0 %v1559
        %v1600 = vpop.f32.mrb[0].mxu0
        %v1601 = vadd.f32 %v1550, %v1600
        %v1602 = vpop.f32.mrb[0].mxu0
        %v1603 = vadd.f32 %v1552, %v1602
        %v1604 = vpop.f32.mrb[0].mxu0
        %v1605 = vpop.f32.mrb[0].mxu0
        %1606 = vdwg.mxu0
        %v1607 = vld [vmem:[%s11] sm:$0xff]
        %1609 = vset.pattern.permute.xlu0 0
        %1610 = vperm.xlu0 %1609, %v1607
        %v1611 = vpop.permute.xlu0 %1610
        %v1613 = vadd.f32 %v1601, %v1611
        %v1614 = vadd.f32 %v1603, %v1611
        %v1615 = vmax.f32 %v1613, 0.0
        %v1616 = vmax.f32 %v1614, 0.0
        %v1617 = vld [vmem:[#allocation7] sm:$0x1]
        %v1618 = vpack.c.bf16 %v1615, %v1615
        %v1619 = vpack.c.bf16 %v1616, %v1616
        %v1620 = vld [vmem:[#allocation2] sm:$0x1]
        %1622 = vset.pattern.permute.xlu0 0
        %1623 = vperm.xlu0 %1622, %v1620
        %v1624 = vpop.permute.xlu0 %1623
        %v1626 = vlaneseq
        %v1627 = vshrl.u32 %v1626, 7
        %v1628 = vsub.s32 0, %v1627
        %v1629 = vrot.slane %v1624, %v1628
        %v1631 = vsel %vm972, %v1617, 0
        %v1634 = vsel %vm696, %v1618, 0
        %v1637 = vsel %vm696, %v1619, 0
        %1639 = vmatprep.subr.bf16.mxu0 %v1637
        %1640 = vmatpush1.bf16.msra.mxu0 %v1634
        %1641 = vmatprep.subr.bf16.mxu0 0
        %1642 = vmatpush1.bf16.msra.mxu0 0
        %1643 = vmatprep.subr.bf16.mxu0 0
        %1644 = vmatpush1.bf16.msra.mxu0 0
        %1645 = vmatprep.subr.bf16.mxu0 0
        %1646 = vmatpush1.bf16.msra.mxu0 0
        %1647 = vmatprep.subr.bf16.mxu0 0
        %1648 = vmatpush1.bf16.msra.mxu0 0
        %1649 = vmatprep.subr.bf16.mxu0 0
        %1650 = vmatpush1.bf16.msra.mxu0 0
        %1651 = vmatprep.subr.bf16.mxu0 0
        %1652 = vmatpush1.bf16.msra.mxu0 0
        %1653 = vmatprep.subr.bf16.mxu0 0
        %1654 = vmatpush1.bf16.msra.mxu0 0
        %1655 = vmatprep.subr.bf16.mxu0 0
        %1656 = vmatpush1.bf16.msra.mxu0 0
        %1657 = vmatprep.subr.bf16.mxu0 0
        %1658 = vmatpush1.bf16.msra.mxu0 0
        %1659 = vmatprep.subr.bf16.mxu0 0
        %1660 = vmatpush1.bf16.msra.mxu0 0
        %1661 = vmatprep.subr.bf16.mxu0 0
        %1662 = vmatpush1.bf16.msra.mxu0 0
        %1663 = vmatprep.subr.bf16.mxu0 0
        %1664 = vmatpush1.bf16.msra.mxu0 0
        %1665 = vmatprep.subr.bf16.mxu0 0
        %1666 = vmatpush1.bf16.msra.mxu0 0
        %1667 = vmatprep.subr.bf16.mxu0 0
        %1668 = vmatpush1.bf16.msra.mxu0 0
        %1669 = vmatprep.subr.bf16.mxu0 0
        %1670 = vmatpush1.bf16.msra.mxu0 0
        %1671 = vmatprep.mubr.bf16.mxu0 0
        %1672 = vmatmul.mubr.bf16.gmra.mrb[0].mxu0 %v1631
        %v1673 = vpop.f32.mrb[0].mxu0
        %v1674 = vadd.f32 %v1629, %v1673
        %v1675 = vpop.f32.mrb[0].mxu0
        %v1676 = vadd.f32 %v1629, %v1675
        %v1677 = vpop.f32.mrb[0].mxu0
        %v1678 = vpop.f32.mrb[0].mxu0
        %1679 = vdwg.mxu0
        %v1680 = vmul.f32 %v1674, 0.5
        %v1681 = vmul.f32 %v1676, 0.5
        %v1682 = vtanh.pop %v1680
        %v1683 = vtanh.pop %v1681
        %v1684 = vadd.f32 %v1682, 1.0
        %v1685 = vadd.f32 %v1683, 1.0
        %v1686 = vmul.f32 %v1684, 0.5
        %v1687 = vmul.f32 %v1685, 0.5
        %v1690 = vcombine.low %v1686, %v1687
        %v1692 = vunpack.c.l.s4 1966171168
        %v1693 = vunpack.c.0.s8 %v1692
        %v1694 = vlaneseq
        %v1695 = vshrl.u32 %v1694, 7
        %v1696 = vsub.s32 %v1693, %v1695
        %v1697 = vrot.slane %v1690, %v1696
        %v1699 = vunpack.c.l.s4 1966171168
        %v1700 = vunpack.c.0.s8 %v1699
        %v1701 = vlaneseq
        %v1702 = vshrl.u32 %v1701, 7
        %v1703 = vsub.s32 %v1700, %v1702
        %v1704 = vrot.slane %v1697, %v1703
        %v1706 = vlaneseq
        %vm1707 = vcmp.ge.s32.totalorder %v1706, 0
        %vm1708 = vcmp.lt.s32.totalorder %v1706, 256
        %vm1709 = vmand %vm1707, %vm1708
        %1710 = vst.msk [vmem:[%s502] sm:$0x3] %vm1709, %v1704
        %p1711 = scmp.lt.s32.totalorder %s29, 1
        %s1712 = scalar_select %p1711, %s29, 1
        %s1713 = smul.addr %s1712, 2
        %s1714 = scalar_lea.vmem %s14, %s1713
        // Predicated region
        $region89: #{unet_forward.1} parent=75 // pred_check
          %p1715 = pneg %p346
        $region90: #{unet_forward.1} parent=75 // pred_check_branch
          %1717 = sbr.rel (%p1715) target = $region92
        $region91: #{unet_forward.1} parent=75 // pred_region
          _
        $region92: #{unet_forward.1} parent=75 // pred_fallthru
          _
      $region76: #{unet_forward.1} parent=5 // pred_fallthru
        _
      %p1718 = scmp.le.s32.totalorder 2, %s24
      // Predicated region
      $region93: #{unet_forward.1} parent=5 // pred_check
        %p1719 = pneg %p1718
      $region94: #{unet_forward.1} parent=5 // pred_check_branch
        %1721 = sbr.rel (%p1719) target = $region96
      $region95: #{unet_forward.1} parent=5 // pred_region
        %s1722 = ssub.s32 %s24, 2
        // Predicated region
        $region97: #{unet_forward.1} parent=95 // pred_check
          %p1723 = pneg %p352
        $region98: #{unet_forward.1} parent=95 // pred_check_branch
          %1725 = sbr.rel (%p1723) target = $region100
        $region99: #{unet_forward.1} parent=95 // pred_region
          %p1726 = scmp.lt.s32.totalorder %s30, 1
          %s1727 = scalar_select %p1726, %s30, 1
          %s1728 = smul.addr %s1727, 2
          %s1729 = scalar_lea.vmem %s14, %s1728
        $region100: #{unet_forward.1} parent=95 // pred_fallthru
          _
      $region96: #{unet_forward.1} parent=5 // pred_fallthru
        _
    $region6: #{unet_forward.1} parent=1 // loop_footer
      %s28 = sadd.s32 1, %s24
    $region7: #{unet_forward.1} parent=1 // loop_footer_branch
      %23 = sbr.rel target = $region3
    $region8: #{unet_forward.1} parent=1 // loop_exit
      _
    %1730 = vsyncpa [#allocation4], 1
    %s1731 = scalar_lea.sflag [#allocation4], 1
    %1732 = vsyncpa %s1731, 1
    %1733 = vsyncpa [#allocation6], 1

</llo_original>
